<compile_context>
chip_gen: v6e
topology: v6e:2x2x1
jax: 0.10.0
libtpu: 0.0.40
codegen_flags: <defaults>
</compile_context>

<pallas_src>
import functools
import math

import jax
import jax.numpy as jnp
from jax.experimental import pallas as pl
from jax.experimental.pallas import tpu as pltpu

EPS = 1e-5  # nn.LayerNorm default eps

_STACKED_KEYS = ("ln1g", "ln1b", "w_qkv", "b_qkv", "w_o", "b_o",
                 "ln2g", "ln2b", "w1", "b1", "w2", "b2")


# ---------------------------------------------------------------------------
# Kernel
# ---------------------------------------------------------------------------


def _layer_norm(x, g, b):
    # x: (B*S, D) f32, g/b: (1, D) f32
    mean = jnp.mean(x, axis=-1, keepdims=True)
    var = jnp.mean((x - mean) ** 2, axis=-1, keepdims=True)
    return (x - mean) * jax.lax.rsqrt(var + EPS) * g + b


def fused_forward_kernel(
    x_ref,                                   # (B*S, D) f32     (constant block)
    ln1g_ref, ln1b_ref,                      # (1, 1, D) f32    (layer-l slice)
    wqkv_ref, bqkv_ref,                      # (1, D, 3*H*di) bf16, (1, 1, 3*H*di) f32
    wo_ref, bo_ref,                          # (1, H*di, D) bf16,   (1, 1, D) f32
    ln2g_ref, ln2b_ref,                      # (1, 1, D) f32
    w1_ref, b1_ref,                          # (1, D, d_ff) bf16,   (1, 1, d_ff) f32
    w2_ref, b2_ref,                          # (1, d_ff, D) bf16,   (1, 1, D) f32
    wc_ref, bc_ref,                          # (D, Vpad) bf16, (1, Vpad) f32 (constant)
    out_ref,                                 # (B*S, Vpad) f32
    x_scratch,                               # VMEM (B*S, D) f32 — carried across layers
    *, batch, num_heads, d_internal,
):
    l = pl.program_id(0)
    num_layers = pl.num_programs(0)

    @pl.when(l == 0)
    def _():
        x_scratch[...] = x_ref[...]

    x = x_scratch[...]                       # (B*S, D) f32 residual stream
    bs, _ = x.shape
    seq = bs // batch
    hd = num_heads * d_internal

    # Additive causal mask bias: 0 where col <= row, -1e30 elsewhere.
    row = jax.lax.broadcasted_iota(jnp.int32, (seq, seq), 0)
    col = jax.lax.broadcasted_iota(jnp.int32, (seq, seq), 1)
    mask = jnp.where(col <= row, 0.0, -1e30).astype(jnp.float32)  # (S, S)

    # ---------------- multi-head attention sublayer ----------------
    xn = _layer_norm(x, ln1g_ref[0], ln1b_ref[0])
    # Fused Q|K|V projection; 1/sqrt(d_k) already folded into the Q columns/bias.
    qkv = jnp.dot(xn.astype(jnp.bfloat16), wqkv_ref[0],
                  preferred_element_type=jnp.float32) + bqkv_ref[0]   # (B*S, 3*hd) f32
    qkv3 = qkv.reshape(batch, seq, 3 * hd)   # free split of the sublane dim (S % 8 == 0)

    head_outs = []
    for h in range(num_heads):               # static, small loop
        q = qkv3[:, :, h * d_internal:(h + 1) * d_internal]
        k = qkv3[:, :, hd + h * d_internal: hd + (h + 1) * d_internal]
        v = qkv3[:, :, 2 * hd + h * d_internal: 2 * hd + (h + 1) * d_internal]
        s = jnp.einsum("bqd,bkd->bqk",
                       q.astype(jnp.bfloat16), k.astype(jnp.bfloat16),
                       preferred_element_type=jnp.float32)            # (B, S, S) f32
        s = s + mask[None, :, :]
        m = jnp.max(s, axis=-1, keepdims=True)
        p = jnp.exp(s - m)
        att = p / jnp.sum(p, axis=-1, keepdims=True)                  # exact divide (f32)
        head_outs.append(
            jnp.einsum("bqk,bkd->bqd",
                       att.astype(jnp.bfloat16), v.astype(jnp.bfloat16),
                       preferred_element_type=jnp.float32))           # (B, S, di) f32

    o_cat = jnp.concatenate(head_outs, axis=-1).reshape(bs, hd)       # (B*S, H*di)
    # Single matmul with the folded (w0 @ wl) output projection.
    mha = jnp.dot(o_cat.astype(jnp.bfloat16), wo_ref[0],
                  preferred_element_type=jnp.float32) + bo_ref[0]
    x = x + mha                              # residual 1

    # ---------------- feed-forward sublayer ----------------
    xn2 = _layer_norm(x, ln2g_ref[0], ln2b_ref[0])
    h1 = jnp.dot(xn2.astype(jnp.bfloat16), w1_ref[0],
                 preferred_element_type=jnp.float32) + b1_ref[0]
    h1 = jnp.maximum(h1, 0.0)                # ReLU (f32, VPU)
    ff = jnp.dot(h1.astype(jnp.bfloat16), w2_ref[0],
                 preferred_element_type=jnp.float32) + b2_ref[0]
    x = x + ff                               # residual 2

    x_scratch[...] = x

    # ---------------- classifier + log_softmax on the last layer step ----------------
    @pl.when(l == num_layers - 1)
    def _():
        # Padded columns have zero weights and -1e30 bias -> never affect max/lse.
        logits = jnp.dot(x.astype(jnp.bfloat16), wc_ref[...],
                         preferred_element_type=jnp.float32) + bc_ref[...]
        m2 = jnp.max(logits, axis=-1, keepdims=True)
        lse = m2 + jnp.log(jnp.sum(jnp.exp(logits - m2), axis=-1, keepdims=True))
        out_ref[...] = logits - lse


# ---------------------------------------------------------------------------
# Parameter fusion + Pallas wrapper
# ---------------------------------------------------------------------------


def prepare_params(params):
    """Fold/fuse the per-layer PyTorch-style params into kernel-friendly form."""
    layers = params["layers"]
    H, D, di = layers[0]["wk"].shape
    d_head = layers[0]["w0"].shape[2]
    scale = di ** (-0.5)

    def fuse_layer(p):
        # Fused QKV weight (columns ordered [Q heads | K heads | V heads]);
        # attention scale folded into the Q columns and Q bias.
        wq = jnp.concatenate([p["wq"][h] * scale for h in range(H)], axis=1)
        wk = jnp.concatenate([p["wk"][h] for h in range(H)], axis=1)
        wv = jnp.concatenate([p["wv"][h] for h in range(H)], axis=1)
        w_qkv = jnp.concatenate([wq, wk, wv], axis=1)                 # (D, 3*H*di)
        bq = jnp.concatenate([p["bq"][h] * scale for h in range(H)], axis=0)
        bk = jnp.concatenate([p["bk"][h] for h in range(H)], axis=0)
        bv = jnp.concatenate([p["bv"][h] for h in range(H)], axis=0)
        b_qkv = jnp.concatenate([bq, bk, bv], axis=0)[None, :]        # (1, 3*H*di)

        # Fold per-head output projection w0[h] into the MHA output linear wl.
        wo_parts = []
        b_o = p["bl"][0]
        for h in range(H):
            wl_slice = p["wl"][h * d_head:(h + 1) * d_head, :]        # (d_head, D)
            wo_parts.append(p["w0"][h] @ wl_slice)                    # (di, D)
            b_o = b_o + p["b0"][h] @ wl_slice
        w_o = jnp.concatenate(wo_parts, axis=0)                       # (H*di, D)

        return dict(ln1g=p["ln1_g"], ln1b=p["ln1_b"],
                    w_qkv=w_qkv, b_qkv=b_qkv, w_o=w_o, b_o=b_o[None, :],
                    ln2g=p["ln2_g"], ln2b=p["ln2_b"],
                    w1=p["w1"], b1=p["b1"], w2=p["w2"], b2=p["b2"])

    fused = [fuse_layer(p) for p in layers]
    stacked = {k: jnp.stack([f[k] for f in fused], axis=0) for k in _STACKED_KEYS}
    # Matmul operands in bf16 (f32 accumulation in-kernel); biases/LN stay f32.
    for k in ("w_qkv", "w_o", "w1", "w2"):
        stacked[k] = stacked[k].astype(jnp.bfloat16)

    # Lane-dense classifier: pad vocab to a multiple of 128 lanes.  Padded
    # columns get zero weights and a -1e30 bias so they never affect the lse.
    V = params["wc"].shape[1]
    vpad = max(128, ((V + 127) // 128) * 128)
    wc_pad = (jnp.zeros((D, vpad), jnp.float32).at[:, :V].set(params["wc"])
              .astype(jnp.bfloat16))
    bc_pad = jnp.full((1, vpad), -1e30, jnp.float32).at[:, :V].set(params["bc"])

    out = dict(emb=params["emb"], pos=params["pos"], wc_pad=wc_pad, bc_pad=bc_pad)
    out.update(stacked)
    return out


@functools.partial(jax.jit, static_argnames=("num_heads", "d_internal", "vocab_size"))
def mha_transformer_forward(indices, fp, *, num_heads, d_internal, vocab_size):
    # indices: (B, S) int32   (batched=True path of the PyTorch module)
    B, S = indices.shape
    x = fp["emb"][indices] + fp["pos"][:S][None, :, :]       # embedding + pos-emb (XLA glue)
    D = x.shape[-1]
    x2 = x.reshape(B * S, D).astype(jnp.float32)             # fold batch into M dim
    L = fp["w_qkv"].shape[0]
    vpad = fp["wc_pad"].shape[1]
    d_ff = fp["w1"].shape[-1]
    hd = num_heads * d_internal

    weights = [fp[k] for k in _STACKED_KEYS] + [fp["wc_pad"], fp["bc_pad"]]

    def layer_spec(arr):
        nd = arr.ndim
        return pl.BlockSpec((1,) + tuple(arr.shape[1:]),
                            lambda l, _nd=nd: (l,) + (0,) * (_nd - 1))

    def const_spec(arr):
        nd = arr.ndim
        return pl.BlockSpec(tuple(arr.shape), lambda l, _nd=nd: (0,) * _nd)

    in_specs = ([const_spec(x2)]
                + [layer_spec(fp[k]) for k in _STACKED_KEYS]
                + [const_spec(fp["wc_pad"]), const_spec(fp["bc_pad"])])

    # Explicit scoped-VMEM budget: streamed layer weights are double-buffered;
    # resident pieces (x, classifier weights, output, activation scratch) plus
    # headroom for in-kernel intermediates (qkv / h1 / scores / logits).
    per_layer = sum(math.prod(fp[k].shape[1:]) * fp[k].dtype.itemsize
                    for k in _STACKED_KEYS)
    resident = (x2.size * 4 + fp["wc_pad"].size * 2 + fp["bc_pad"].size * 4
                + B * S * vpad * 4 + B * S * D * 4)
    interm = 4 * B * S * (3 * hd + d_ff + vpad)
    est = 2 * per_layer + 2 * resident + interm
    vmem_limit = int(min(max(2 * est, 32 * 1024 * 1024), 64 * 1024 * 1024))

    out = pl.pallas_call(
        functools.partial(fused_forward_kernel, batch=B,
                          num_heads=num_heads, d_internal=d_internal),
        out_shape=jax.ShapeDtypeStruct((B * S, vpad), jnp.float32),
        grid=(L,),
        in_specs=in_specs,
        out_specs=pl.BlockSpec((B * S, vpad), lambda l: (0, 0)),
        scratch_shapes=[pltpu.VMEM((B * S, D), jnp.float32)],
        compiler_params=pltpu.CompilerParams(
            dimension_semantics=("arbitrary",),          # layer steps carry state
            vmem_limit_bytes=vmem_limit),
    )(x2, *weights)

    return out.reshape(B, S, vpad)[:, :, :vocab_size]    # strip lane padding


# ---------------------------------------------------------------------------
# Deterministic parameter init + pure-JAX reference
# ---------------------------------------------------------------------------


def init_params(key, vocab_size, num_positions, d_model, d_internal,
                num_layers, num_heads):
    d_head = d_model // num_heads
    d_ff = 4 * d_model

    def w(k, shape, scale=0.05):
        return jax.random.normal(k, shape, jnp.float32) * scale

    keys = iter(jax.random.split(key, 4 + num_layers * 16))
    params = {
        "emb": w(next(keys), (vocab_size, d_model), 0.1),
        "pos": w(next(keys), (num_positions, d_model), 0.1),
        "wc": w(next(keys), (d_model, vocab_size)),
        "bc": w(next(keys), (1, vocab_size)),
        "layers": [],
    }
    for _ in range(num_layers):
        lp = {
            "ln1_g": jnp.ones((1, d_model), jnp.float32),
            "ln1_b": jnp.zeros((1, d_model), jnp.float32),
            "wk": w(next(keys), (num_heads, d_model, d_internal)),
            "bk": w(next(keys), (num_heads, d_internal)),
            "wq": w(next(keys), (num_heads, d_model, d_internal)),
            "bq": w(next(keys), (num_heads, d_internal)),
            "wv": w(next(keys), (num_heads, d_model, d_internal)),
            "bv": w(next(keys), (num_heads, d_internal)),
            "w0": w(next(keys), (num_heads, d_internal, d_head)),
            "b0": w(next(keys), (num_heads, d_head)),
            "wl": w(next(keys), (d_model, d_model)),
            "bl": w(next(keys), (1, d_model)),
            "ln2_g": jnp.ones((1, d_model), jnp.float32),
            "ln2_b": jnp.zeros((1, d_model), jnp.float32),
            "w1": w(next(keys), (d_model, d_ff)),
            "b1": w(next(keys), (1, d_ff)),
            "w2": w(next(keys), (d_ff, d_model)),
            "b2": w(next(keys), (1, d_model)),
        }
        params["layers"].append(lp)
    return params


def ref_forward(indices, params):
    def ln(x, g, b):
        mu = jnp.mean(x, -1, keepdims=True)
        var = jnp.mean((x - mu) ** 2, -1, keepdims=True)
        return (x - mu) / jnp.sqrt(var + EPS) * g + b

    S = indices.shape[1]
    x = params["emb"][indices] + params["pos"][:S][None]
    tril = jnp.tril(jnp.ones((S, S), bool))
    for p in params["layers"]:
        xn = ln(x, p["ln1_g"], p["ln1_b"])
        heads = []
        H = p["wk"].shape[0]
        for h in range(H):
            k = xn @ p["wk"][h] + p["bk"][h]
            q = xn @ p["wq"][h] + p["bq"][h]
            v = xn @ p["wv"][h] + p["bv"][h]
            s = jnp.einsum("bqd,bkd->bqk", q, k) * (k.shape[-1] ** -0.5)
            s = jnp.where(tril[None], s, -jnp.inf)
            a = jax.nn.softmax(s, axis=-1)
            o = jnp.einsum("bqk,bkd->bqd", a, v) @ p["w0"][h] + p["b0"][h]
            heads.append(o)
        mha = jnp.concatenate(heads, -1) @ p["wl"] + p["bl"]
        x = mha + x
        xn2 = ln(x, p["ln2_g"], p["ln2_b"])
        ff = jax.nn.relu(xn2 @ p["w1"] + p["b1"]) @ p["w2"] + p["b2"]
        x = x + ff
    logits = x @ params["wc"] + params["bc"]
    return jax.nn.log_softmax(logits, axis=-1)


# ---------------------------------------------------------------------------
# Main
# ---------------------------------------------------------------------------

if __name__ == "__main__":
    vocab_size = 16
    num_positions = 8     # seq length == num_positions (tril buffer size)
    d_model = 32
    d_internal = 16
    num_layers = 2
    num_heads = 4
    batch = 2

    root = jax.random.PRNGKey(0)
    k_idx, k_par = jax.random.split(root)

    indices = jax.random.randint(k_idx, (batch, num_positions), 0, vocab_size,
                                 dtype=jnp.int32)
    params = init_params(k_par, vocab_size, num_positions, d_model, d_internal,
                         num_layers, num_heads)
    fparams = prepare_params(params)

    out = mha_transformer_forward(indices, fparams,
                                  num_heads=num_heads,
                                  d_internal=d_internal,
                                  vocab_size=vocab_size)
    out = jax.block_until_ready(out)

    ref = ref_forward(indices, params)
    assert out.shape == (batch, num_positions, vocab_size)
    assert bool(jnp.all(jnp.isfinite(out)))
    # Tolerance covers the bf16 matmul operands (f32 accumulation) vs the f32 ref.
    assert bool(jnp.allclose(out, ref, rtol=2e-2, atol=2e-2)), (
        f"max abs err = {jnp.max(jnp.abs(out - ref))}")

    print("KERNEL_OK")
</pallas_src>

<mosaic_0001>
module attributes {stable_mosaic.version = 11 : i64} {
  func.func @fused_forward_kernel(%arg0: i32, %arg1: memref<16x32xf32, #tpu.memory_space<vmem>>, %arg2: memref<1x1x32xf32, #tpu.memory_space<vmem>>, %arg3: memref<1x1x32xf32, #tpu.memory_space<vmem>>, %arg4: memref<1x32x192xbf16, #tpu.memory_space<vmem>>, %arg5: memref<1x1x192xf32, #tpu.memory_space<vmem>>, %arg6: memref<1x64x32xbf16, #tpu.memory_space<vmem>>, %arg7: memref<1x1x32xf32, #tpu.memory_space<vmem>>, %arg8: memref<1x1x32xf32, #tpu.memory_space<vmem>>, %arg9: memref<1x1x32xf32, #tpu.memory_space<vmem>>, %arg10: memref<1x32x128xbf16, #tpu.memory_space<vmem>>, %arg11: memref<1x1x128xf32, #tpu.memory_space<vmem>>, %arg12: memref<1x128x32xbf16, #tpu.memory_space<vmem>>, %arg13: memref<1x1x32xf32, #tpu.memory_space<vmem>>, %arg14: memref<32x128xbf16, #tpu.memory_space<vmem>>, %arg15: memref<1x128xf32, #tpu.memory_space<vmem>>, %arg16: memref<16x128xf32, #tpu.memory_space<vmem>>, %arg17: memref<16x32xf32, #tpu.memory_space<vmem>>) attributes {dimension_semantics = [#tpu.dimension_semantics<arbitrary>], iteration_bounds = array<i64: 2>, scalar_prefetch = 0 : i64, scratch_operands = 1 : i64, tpu.core_type = #tpu.core_type<tc>, window_params = [{pipeline_mode = #tpu.pipeline_mode<synchronous>, transform_indices = @transform_0, window_bounds = array<i64: 16, 32>}, {transform_indices = @transform_1, window_bounds = array<i64: 1, 1, 32>}, {transform_indices = @transform_2, window_bounds = array<i64: 1, 1, 32>}, {transform_indices = @transform_3, window_bounds = array<i64: 1, 32, 192>}, {transform_indices = @transform_4, window_bounds = array<i64: 1, 1, 192>}, {transform_indices = @transform_5, window_bounds = array<i64: 1, 64, 32>}, {transform_indices = @transform_6, window_bounds = array<i64: 1, 1, 32>}, {transform_indices = @transform_7, window_bounds = array<i64: 1, 1, 32>}, {transform_indices = @transform_8, window_bounds = array<i64: 1, 1, 32>}, {transform_indices = @transform_9, window_bounds = array<i64: 1, 32, 128>}, {transform_indices = @transform_10, window_bounds = array<i64: 1, 1, 128>}, {transform_indices = @transform_11, window_bounds = array<i64: 1, 128, 32>}, {transform_indices = @transform_12, window_bounds = array<i64: 1, 1, 32>}, {pipeline_mode = #tpu.pipeline_mode<synchronous>, transform_indices = @transform_13, window_bounds = array<i64: 32, 128>}, {pipeline_mode = #tpu.pipeline_mode<synchronous>, transform_indices = @transform_14, window_bounds = array<i64: 1, 128>}, {pipeline_mode = #tpu.pipeline_mode<synchronous>, transform_indices = @transform_15, window_bounds = array<i64: 16, 128>}]} {
    %c0_i32 = arith.constant 0 : i32
    %0 = arith.cmpi eq, %arg0, %c0_i32 : i32
    %1 = arith.extui %0 : i1 to i32
    %c0_i32_0 = arith.constant 0 : i32
    %2 = arith.cmpi ne, %1, %c0_i32_0 : i32
    scf.if %2 {
      %c0_73 = arith.constant 0 : index
      %c0_74 = arith.constant 0 : index
      %189 = vector.load %arg1[%c0_73, %c0_74] : memref<16x32xf32, #tpu.memory_space<vmem>>, vector<16x32xf32>
      %c0_75 = arith.constant 0 : index
      %c0_76 = arith.constant 0 : index
      %190 = vector.load %arg17[%c0_75, %c0_76] : memref<16x32xf32, #tpu.memory_space<vmem>>, vector<16x32xf32>
      tpu.vector_store %arg17[%c0_75, %c0_76], %189 {strides = array<i32>} : memref<16x32xf32, #tpu.memory_space<vmem>>, vector<16x32xf32>,
    } else {
    }
    %c0 = arith.constant 0 : index
    %c0_1 = arith.constant 0 : index
    %3 = vector.load %arg17[%c0, %c0_1] : memref<16x32xf32, #tpu.memory_space<vmem>>, vector<16x32xf32>
    %4 = tpu.iota {dimensions = array<i32: 0>} : vector<8x8xi32>
    %5 = tpu.iota {dimensions = array<i32: 1>} : vector<8x8xi32>
    %6 = arith.cmpi sle, %5, %4 : vector<8x8xi32>
    %cst = arith.constant 0.000000e+00 : f32
    %cst_2 = arith.constant -1.000000e+30 : f32
    %7 = vector.broadcast %cst : f32 to vector<8x8xf32>
    %8 = vector.broadcast %cst_2 : f32 to vector<8x8xf32>
    %9 = arith.select %6, %7, %8 : vector<8x8xi1>, vector<8x8xf32>
    %c0_3 = arith.constant 0 : index
    %c0_4 = arith.constant 0 : index
    %c0_5 = arith.constant 0 : index
    %10 = vector.load %arg2[%c0_3, %c0_4, %c0_5] : memref<1x1x32xf32, #tpu.memory_space<vmem>>, vector<1x1x32xf32>
    %11 = vector.shape_cast %10 : vector<1x1x32xf32> to vector<1x32xf32>
    %c0_6 = arith.constant 0 : index
    %c0_7 = arith.constant 0 : index
    %c0_8 = arith.constant 0 : index
    %12 = vector.load %arg3[%c0_6, %c0_7, %c0_8] : memref<1x1x32xf32, #tpu.memory_space<vmem>>, vector<1x1x32xf32>
    %13 = vector.shape_cast %12 : vector<1x1x32xf32> to vector<1x32xf32>
    %cst_9 = arith.constant dense<0.000000e+00> : vector<16xf32>
    %14 = vector.multi_reduction <add>, %3, %cst_9 [1] : vector<16x32xf32> to vector<16xf32>
    %15 = vector.shape_cast %14 : vector<16xf32> to vector<16x1xf32>
    %cst_10 = arith.constant 3.200000e+01 : f32
    %16 = vector.broadcast %cst_10 : f32 to vector<16x1xf32>
    %17 = arith.divf %15, %16 : vector<16x1xf32>
    %18 = vector.broadcast %17 : vector<16x1xf32> to vector<16x32xf32>
    %19 = arith.subf %3, %18 : vector<16x32xf32>
    %20 = arith.mulf %19, %19 : vector<16x32xf32>
    %cst_11 = arith.constant dense<0.000000e+00> : vector<16xf32>
    %21 = vector.multi_reduction <add>, %20, %cst_11 [1] : vector<16x32xf32> to vector<16xf32>
    %22 = vector.shape_cast %21 : vector<16xf32> to vector<16x1xf32>
    %cst_12 = arith.constant 3.200000e+01 : f32
    %23 = vector.broadcast %cst_12 : f32 to vector<16x1xf32>
    %24 = arith.divf %22, %23 : vector<16x1xf32>
    %25 = vector.broadcast %17 : vector<16x1xf32> to vector<16x32xf32>
    %26 = arith.subf %3, %25 : vector<16x32xf32>
    %cst_13 = arith.constant 9.99999974E-6 : f32
    %27 = vector.broadcast %cst_13 : f32 to vector<16x1xf32>
    %28 = arith.addf %24, %27 : vector<16x1xf32>
    %29 = math.rsqrt %28 : vector<16x1xf32>
    %30 = vector.broadcast %29 : vector<16x1xf32> to vector<16x32xf32>
    %31 = arith.mulf %26, %30 : vector<16x32xf32>
    %32 = vector.broadcast %11 : vector<1x32xf32> to vector<16x32xf32>
    %33 = arith.mulf %31, %32 : vector<16x32xf32>
    %34 = vector.broadcast %13 : vector<1x32xf32> to vector<16x32xf32>
    %35 = arith.addf %33, %34 : vector<16x32xf32>
    %36 = arith.truncf %35 : vector<16x32xf32> to vector<16x32xbf16>
    %c0_14 = arith.constant 0 : index
    %c0_15 = arith.constant 0 : index
    %c0_16 = arith.constant 0 : index
    %37 = vector.load %arg4[%c0_14, %c0_15, %c0_16] : memref<1x32x192xbf16, #tpu.memory_space<vmem>>, vector<1x32x192xbf16>
    %38 = vector.shape_cast %37 : vector<1x32x192xbf16> to vector<32x192xbf16>
    %cst_17 = arith.constant dense<0.000000e+00> : vector<16x192xf32>
    %39 = tpu.matmul %36, %38, %cst_17 {dimension_numbers = #tpu.dot_dimension_numbers<[1], [0], [0], [1], [0, 0, 1, 1], [], []>} : vector<16x32xbf16>, vector<32x192xbf16>, vector<16x192xf32> -> vector<16x192xf32>
    %c0_18 = arith.constant 0 : index
    %c0_19 = arith.constant 0 : index
    %c0_20 = arith.constant 0 : index
    %40 = vector.load %arg5[%c0_18, %c0_19, %c0_20] : memref<1x1x192xf32, #tpu.memory_space<vmem>>, vector<1x1x192xf32>
    %41 = vector.shape_cast %40 : vector<1x1x192xf32> to vector<1x192xf32>
    %42 = vector.broadcast %41 : vector<1x192xf32> to vector<16x192xf32>
    %43 = arith.addf %39, %42 : vector<16x192xf32>
    %44 = vector.shape_cast %43 : vector<16x192xf32> to vector<2x8x192xf32>
    %45 = vector.extract_strided_slice %44 {offsets = [0, 0, 0], sizes = [2, 8, 16], strides = [1, 1, 1]} : vector<2x8x192xf32> to vector<2x8x16xf32>
    %46 = vector.extract_strided_slice %44 {offsets = [0, 0, 64], sizes = [2, 8, 16], strides = [1, 1, 1]} : vector<2x8x192xf32> to vector<2x8x16xf32>
    %47 = vector.extract_strided_slice %44 {offsets = [0, 0, 128], sizes = [2, 8, 16], strides = [1, 1, 1]} : vector<2x8x192xf32> to vector<2x8x16xf32>
    %48 = arith.truncf %45 : vector<2x8x16xf32> to vector<2x8x16xbf16>
    %49 = arith.truncf %46 : vector<2x8x16xf32> to vector<2x8x16xbf16>
    "tpu.trace_start"() <{level = 10 : i32, message = "bqd,bkd->bqk"}> : () -> ()
    %cst_21 = arith.constant dense<0.000000e+00> : vector<2x8x8xf32>
    %50 = tpu.matmul %48, %49, %cst_21 {dimension_numbers = #tpu.dot_dimension_numbers<[2], [2], [1], [1], [0, 0, 0, 1, 1, 1], [0], [0]>} : vector<2x8x16xbf16>, vector<2x8x16xbf16>, vector<2x8x8xf32> -> vector<2x8x8xf32>
    "tpu.trace_stop"() : () -> ()
    %51 = vector.shape_cast %9 : vector<8x8xf32> to vector<1x8x8xf32>
    %52 = vector.broadcast %51 : vector<1x8x8xf32> to vector<2x8x8xf32>
    %53 = arith.addf %50, %52 : vector<2x8x8xf32>
    %cst_22 = arith.constant dense<0xFF800000> : vector<2x8xf32>
    %54 = vector.multi_reduction <maximumf>, %53, %cst_22 [2] : vector<2x8x8xf32> to vector<2x8xf32>
    %55 = vector.shape_cast %54 : vector<2x8xf32> to vector<2x8x1xf32>
    %56 = vector.broadcast %55 : vector<2x8x1xf32> to vector<2x8x8xf32>
    %57 = arith.subf %53, %56 : vector<2x8x8xf32>
    %58 = math.exp %57 : vector<2x8x8xf32>
    %cst_23 = arith.constant dense<0.000000e+00> : vector<2x8xf32>
    %59 = vector.multi_reduction <add>, %58, %cst_23 [2] : vector<2x8x8xf32> to vector<2x8xf32>
    %60 = vector.shape_cast %59 : vector<2x8xf32> to vector<2x8x1xf32>
    %61 = vector.broadcast %60 : vector<2x8x1xf32> to vector<2x8x8xf32>
    %62 = arith.divf %58, %61 : vector<2x8x8xf32>
    %63 = arith.truncf %62 : vector<2x8x8xf32> to vector<2x8x8xbf16>
    %64 = arith.truncf %47 : vector<2x8x16xf32> to vector<2x8x16xbf16>
    "tpu.trace_start"() <{level = 10 : i32, message = "bqk,bkd->bqd"}> : () -> ()
    %cst_24 = arith.constant dense<0.000000e+00> : vector<2x8x16xf32>
    %65 = tpu.matmul %63, %64, %cst_24 {dimension_numbers = #tpu.dot_dimension_numbers<[2], [1], [1], [2], [0, 0, 0, 1, 1, 2], [0], [0]>} : vector<2x8x8xbf16>, vector<2x8x16xbf16>, vector<2x8x16xf32> -> vector<2x8x16xf32>
    "tpu.trace_stop"() : () -> ()
    %66 = vector.extract_strided_slice %44 {offsets = [0, 0, 16], sizes = [2, 8, 16], strides = [1, 1, 1]} : vector<2x8x192xf32> to vector<2x8x16xf32>
    %67 = vector.extract_strided_slice %44 {offsets = [0, 0, 80], sizes = [2, 8, 16], strides = [1, 1, 1]} : vector<2x8x192xf32> to vector<2x8x16xf32>
    %68 = vector.extract_strided_slice %44 {offsets = [0, 0, 144], sizes = [2, 8, 16], strides = [1, 1, 1]} : vector<2x8x192xf32> to vector<2x8x16xf32>
    %69 = arith.truncf %66 : vector<2x8x16xf32> to vector<2x8x16xbf16>
    %70 = arith.truncf %67 : vector<2x8x16xf32> to vector<2x8x16xbf16>
    "tpu.trace_start"() <{level = 10 : i32, message = "bqd,bkd->bqk"}> : () -> ()
    %cst_25 = arith.constant dense<0.000000e+00> : vector<2x8x8xf32>
    %71 = tpu.matmul %69, %70, %cst_25 {dimension_numbers = #tpu.dot_dimension_numbers<[2], [2], [1], [1], [0, 0, 0, 1, 1, 1], [0], [0]>} : vector<2x8x16xbf16>, vector<2x8x16xbf16>, vector<2x8x8xf32> -> vector<2x8x8xf32>
    "tpu.trace_stop"() : () -> ()
    %72 = vector.shape_cast %9 : vector<8x8xf32> to vector<1x8x8xf32>
    %73 = vector.broadcast %72 : vector<1x8x8xf32> to vector<2x8x8xf32>
    %74 = arith.addf %71, %73 : vector<2x8x8xf32>
    %cst_26 = arith.constant dense<0xFF800000> : vector<2x8xf32>
    %75 = vector.multi_reduction <maximumf>, %74, %cst_26 [2] : vector<2x8x8xf32> to vector<2x8xf32>
    %76 = vector.shape_cast %75 : vector<2x8xf32> to vector<2x8x1xf32>
    %77 = vector.broadcast %76 : vector<2x8x1xf32> to vector<2x8x8xf32>
    %78 = arith.subf %74, %77 : vector<2x8x8xf32>
    %79 = math.exp %78 : vector<2x8x8xf32>
    %cst_27 = arith.constant dense<0.000000e+00> : vector<2x8xf32>
    %80 = vector.multi_reduction <add>, %79, %cst_27 [2] : vector<2x8x8xf32> to vector<2x8xf32>
    %81 = vector.shape_cast %80 : vector<2x8xf32> to vector<2x8x1xf32>
    %82 = vector.broadcast %81 : vector<2x8x1xf32> to vector<2x8x8xf32>
    %83 = arith.divf %79, %82 : vector<2x8x8xf32>
    %84 = arith.truncf %83 : vector<2x8x8xf32> to vector<2x8x8xbf16>
    %85 = arith.truncf %68 : vector<2x8x16xf32> to vector<2x8x16xbf16>
    "tpu.trace_start"() <{level = 10 : i32, message = "bqk,bkd->bqd"}> : () -> ()
    %cst_28 = arith.constant dense<0.000000e+00> : vector<2x8x16xf32>
    %86 = tpu.matmul %84, %85, %cst_28 {dimension_numbers = #tpu.dot_dimension_numbers<[2], [1], [1], [2], [0, 0, 0, 1, 1, 2], [0], [0]>} : vector<2x8x8xbf16>, vector<2x8x16xbf16>, vector<2x8x16xf32> -> vector<2x8x16xf32>
    "tpu.trace_stop"() : () -> ()
    %87 = vector.extract_strided_slice %44 {offsets = [0, 0, 32], sizes = [2, 8, 16], strides = [1, 1, 1]} : vector<2x8x192xf32> to vector<2x8x16xf32>
    %88 = vector.extract_strided_slice %44 {offsets = [0, 0, 96], sizes = [2, 8, 16], strides = [1, 1, 1]} : vector<2x8x192xf32> to vector<2x8x16xf32>
    %89 = vector.extract_strided_slice %44 {offsets = [0, 0, 160], sizes = [2, 8, 16], strides = [1, 1, 1]} : vector<2x8x192xf32> to vector<2x8x16xf32>
    %90 = arith.truncf %87 : vector<2x8x16xf32> to vector<2x8x16xbf16>
    %91 = arith.truncf %88 : vector<2x8x16xf32> to vector<2x8x16xbf16>
    "tpu.trace_start"() <{level = 10 : i32, message = "bqd,bkd->bqk"}> : () -> ()
    %cst_29 = arith.constant dense<0.000000e+00> : vector<2x8x8xf32>
    %92 = tpu.matmul %90, %91, %cst_29 {dimension_numbers = #tpu.dot_dimension_numbers<[2], [2], [1], [1], [0, 0, 0, 1, 1, 1], [0], [0]>} : vector<2x8x16xbf16>, vector<2x8x16xbf16>, vector<2x8x8xf32> -> vector<2x8x8xf32>
    "tpu.trace_stop"() : () -> ()
    %93 = vector.shape_cast %9 : vector<8x8xf32> to vector<1x8x8xf32>
    %94 = vector.broadcast %93 : vector<1x8x8xf32> to vector<2x8x8xf32>
    %95 = arith.addf %92, %94 : vector<2x8x8xf32>
    %cst_30 = arith.constant dense<0xFF800000> : vector<2x8xf32>
    %96 = vector.multi_reduction <maximumf>, %95, %cst_30 [2] : vector<2x8x8xf32> to vector<2x8xf32>
    %97 = vector.shape_cast %96 : vector<2x8xf32> to vector<2x8x1xf32>
    %98 = vector.broadcast %97 : vector<2x8x1xf32> to vector<2x8x8xf32>
    %99 = arith.subf %95, %98 : vector<2x8x8xf32>
    %100 = math.exp %99 : vector<2x8x8xf32>
    %cst_31 = arith.constant dense<0.000000e+00> : vector<2x8xf32>
    %101 = vector.multi_reduction <add>, %100, %cst_31 [2] : vector<2x8x8xf32> to vector<2x8xf32>
    %102 = vector.shape_cast %101 : vector<2x8xf32> to vector<2x8x1xf32>
    %103 = vector.broadcast %102 : vector<2x8x1xf32> to vector<2x8x8xf32>
    %104 = arith.divf %100, %103 : vector<2x8x8xf32>
    %105 = arith.truncf %104 : vector<2x8x8xf32> to vector<2x8x8xbf16>
    %106 = arith.truncf %89 : vector<2x8x16xf32> to vector<2x8x16xbf16>
    "tpu.trace_start"() <{level = 10 : i32, message = "bqk,bkd->bqd"}> : () -> ()
    %cst_32 = arith.constant dense<0.000000e+00> : vector<2x8x16xf32>
    %107 = tpu.matmul %105, %106, %cst_32 {dimension_numbers = #tpu.dot_dimension_numbers<[2], [1], [1], [2], [0, 0, 0, 1, 1, 2], [0], [0]>} : vector<2x8x8xbf16>, vector<2x8x16xbf16>, vector<2x8x16xf32> -> vector<2x8x16xf32>
    "tpu.trace_stop"() : () -> ()
    %108 = vector.extract_strided_slice %44 {offsets = [0, 0, 48], sizes = [2, 8, 16], strides = [1, 1, 1]} : vector<2x8x192xf32> to vector<2x8x16xf32>
    %109 = vector.extract_strided_slice %44 {offsets = [0, 0, 112], sizes = [2, 8, 16], strides = [1, 1, 1]} : vector<2x8x192xf32> to vector<2x8x16xf32>
    %110 = vector.extract_strided_slice %44 {offsets = [0, 0, 176], sizes = [2, 8, 16], strides = [1, 1, 1]} : vector<2x8x192xf32> to vector<2x8x16xf32>
    %111 = arith.truncf %108 : vector<2x8x16xf32> to vector<2x8x16xbf16>
    %112 = arith.truncf %109 : vector<2x8x16xf32> to vector<2x8x16xbf16>
    "tpu.trace_start"() <{level = 10 : i32, message = "bqd,bkd->bqk"}> : () -> ()
    %cst_33 = arith.constant dense<0.000000e+00> : vector<2x8x8xf32>
    %113 = tpu.matmul %111, %112, %cst_33 {dimension_numbers = #tpu.dot_dimension_numbers<[2], [2], [1], [1], [0, 0, 0, 1, 1, 1], [0], [0]>} : vector<2x8x16xbf16>, vector<2x8x16xbf16>, vector<2x8x8xf32> -> vector<2x8x8xf32>
    "tpu.trace_stop"() : () -> ()
    %114 = vector.shape_cast %9 : vector<8x8xf32> to vector<1x8x8xf32>
    %115 = vector.broadcast %114 : vector<1x8x8xf32> to vector<2x8x8xf32>
    %116 = arith.addf %113, %115 : vector<2x8x8xf32>
    %cst_34 = arith.constant dense<0xFF800000> : vector<2x8xf32>
    %117 = vector.multi_reduction <maximumf>, %116, %cst_34 [2] : vector<2x8x8xf32> to vector<2x8xf32>
    %118 = vector.shape_cast %117 : vector<2x8xf32> to vector<2x8x1xf32>
    %119 = vector.broadcast %118 : vector<2x8x1xf32> to vector<2x8x8xf32>
    %120 = arith.subf %116, %119 : vector<2x8x8xf32>
    %121 = math.exp %120 : vector<2x8x8xf32>
    %cst_35 = arith.constant dense<0.000000e+00> : vector<2x8xf32>
    %122 = vector.multi_reduction <add>, %121, %cst_35 [2] : vector<2x8x8xf32> to vector<2x8xf32>
    %123 = vector.shape_cast %122 : vector<2x8xf32> to vector<2x8x1xf32>
    %124 = vector.broadcast %123 : vector<2x8x1xf32> to vector<2x8x8xf32>
    %125 = arith.divf %121, %124 : vector<2x8x8xf32>
    %126 = arith.truncf %125 : vector<2x8x8xf32> to vector<2x8x8xbf16>
    %127 = arith.truncf %110 : vector<2x8x16xf32> to vector<2x8x16xbf16>
    "tpu.trace_start"() <{level = 10 : i32, message = "bqk,bkd->bqd"}> : () -> ()
    %cst_36 = arith.constant dense<0.000000e+00> : vector<2x8x16xf32>
    %128 = tpu.matmul %126, %127, %cst_36 {dimension_numbers = #tpu.dot_dimension_numbers<[2], [1], [1], [2], [0, 0, 0, 1, 1, 2], [0], [0]>} : vector<2x8x8xbf16>, vector<2x8x16xbf16>, vector<2x8x16xf32> -> vector<2x8x16xf32>
    "tpu.trace_stop"() : () -> ()
    %129 = tpu.concatenate %65, %86, %107, %128 in 2 : vector<2x8x16xf32>, vector<2x8x16xf32>, vector<2x8x16xf32>, vector<2x8x16xf32> -> vector<2x8x64xf32>
    %130 = vector.shape_cast %129 : vector<2x8x64xf32> to vector<16x64xf32>
    %131 = arith.truncf %130 : vector<16x64xf32> to vector<16x64xbf16>
    %c0_37 = arith.constant 0 : index
    %c0_38 = arith.constant 0 : index
    %c0_39 = arith.constant 0 : index
    %132 = vector.load %arg6[%c0_37, %c0_38, %c0_39] : memref<1x64x32xbf16, #tpu.memory_space<vmem>>, vector<1x64x32xbf16>
    %133 = vector.shape_cast %132 : vector<1x64x32xbf16> to vector<64x32xbf16>
    %cst_40 = arith.constant dense<0.000000e+00> : vector<16x32xf32>
    %134 = tpu.matmul %131, %133, %cst_40 {dimension_numbers = #tpu.dot_dimension_numbers<[1], [0], [0], [1], [0, 0, 1, 1], [], []>} : vector<16x64xbf16>, vector<64x32xbf16>, vector<16x32xf32> -> vector<16x32xf32>
    %c0_41 = arith.constant 0 : index
    %c0_42 = arith.constant 0 : index
    %c0_43 = arith.constant 0 : index
    %135 = vector.load %arg7[%c0_41, %c0_42, %c0_43] : memref<1x1x32xf32, #tpu.memory_space<vmem>>, vector<1x1x32xf32>
    %136 = vector.shape_cast %135 : vector<1x1x32xf32> to vector<1x32xf32>
    %137 = vector.broadcast %136 : vector<1x32xf32> to vector<16x32xf32>
    %138 = arith.addf %134, %137 : vector<16x32xf32>
    %139 = arith.addf %3, %138 : vector<16x32xf32>
    %c0_44 = arith.constant 0 : index
    %c0_45 = arith.constant 0 : index
    %c0_46 = arith.constant 0 : index
    %140 = vector.load %arg8[%c0_44, %c0_45, %c0_46] : memref<1x1x32xf32, #tpu.memory_space<vmem>>, vector<1x1x32xf32>
    %141 = vector.shape_cast %140 : vector<1x1x32xf32> to vector<1x32xf32>
    %c0_47 = arith.constant 0 : index
    %c0_48 = arith.constant 0 : index
    %c0_49 = arith.constant 0 : index
    %142 = vector.load %arg9[%c0_47, %c0_48, %c0_49] : memref<1x1x32xf32, #tpu.memory_space<vmem>>, vector<1x1x32xf32>
    %143 = vector.shape_cast %142 : vector<1x1x32xf32> to vector<1x32xf32>
    %cst_50 = arith.constant dense<0.000000e+00> : vector<16xf32>
    %144 = vector.multi_reduction <add>, %139, %cst_50 [1] : vector<16x32xf32> to vector<16xf32>
    %145 = vector.shape_cast %144 : vector<16xf32> to vector<16x1xf32>
    %cst_51 = arith.constant 3.200000e+01 : f32
    %146 = vector.broadcast %cst_51 : f32 to vector<16x1xf32>
    %147 = arith.divf %145, %146 : vector<16x1xf32>
    %148 = vector.broadcast %147 : vector<16x1xf32> to vector<16x32xf32>
    %149 = arith.subf %139, %148 : vector<16x32xf32>
    %150 = arith.mulf %149, %149 : vector<16x32xf32>
    %cst_52 = arith.constant dense<0.000000e+00> : vector<16xf32>
    %151 = vector.multi_reduction <add>, %150, %cst_52 [1] : vector<16x32xf32> to vector<16xf32>
    %152 = vector.shape_cast %151 : vector<16xf32> to vector<16x1xf32>
    %cst_53 = arith.constant 3.200000e+01 : f32
    %153 = vector.broadcast %cst_53 : f32 to vector<16x1xf32>
    %154 = arith.divf %152, %153 : vector<16x1xf32>
    %155 = vector.broadcast %147 : vector<16x1xf32> to vector<16x32xf32>
    %156 = arith.subf %139, %155 : vector<16x32xf32>
    %cst_54 = arith.constant 9.99999974E-6 : f32
    %157 = vector.broadcast %cst_54 : f32 to vector<16x1xf32>
    %158 = arith.addf %154, %157 : vector<16x1xf32>
    %159 = math.rsqrt %158 : vector<16x1xf32>
    %160 = vector.broadcast %159 : vector<16x1xf32> to vector<16x32xf32>
    %161 = arith.mulf %156, %160 : vector<16x32xf32>
    %162 = vector.broadcast %141 : vector<1x32xf32> to vector<16x32xf32>
    %163 = arith.mulf %161, %162 : vector<16x32xf32>
    %164 = vector.broadcast %143 : vector<1x32xf32> to vector<16x32xf32>
    %165 = arith.addf %163, %164 : vector<16x32xf32>
    %166 = arith.truncf %165 : vector<16x32xf32> to vector<16x32xbf16>
    %c0_55 = arith.constant 0 : index
    %c0_56 = arith.constant 0 : index
    %c0_57 = arith.constant 0 : index
    %167 = vector.load %arg10[%c0_55, %c0_56, %c0_57] : memref<1x32x128xbf16, #tpu.memory_space<vmem>>, vector<1x32x128xbf16>
    %168 = vector.shape_cast %167 : vector<1x32x128xbf16> to vector<32x128xbf16>
    %cst_58 = arith.constant dense<0.000000e+00> : vector<16x128xf32>
    %169 = tpu.matmul %166, %168, %cst_58 {dimension_numbers = #tpu.dot_dimension_numbers<[1], [0], [0], [1], [0, 0, 1, 1], [], []>} : vector<16x32xbf16>, vector<32x128xbf16>, vector<16x128xf32> -> vector<16x128xf32>
    %c0_59 = arith.constant 0 : index
    %c0_60 = arith.constant 0 : index
    %c0_61 = arith.constant 0 : index
    %170 = vector.load %arg11[%c0_59, %c0_60, %c0_61] : memref<1x1x128xf32, #tpu.memory_space<vmem>>, vector<1x1x128xf32>
    %171 = vector.shape_cast %170 : vector<1x1x128xf32> to vector<1x128xf32>
    %172 = vector.broadcast %171 : vector<1x128xf32> to vector<16x128xf32>
    %173 = arith.addf %169, %172 : vector<16x128xf32>
    %cst_62 = arith.constant 0.000000e+00 : f32
    %174 = vector.broadcast %cst_62 : f32 to vector<16x128xf32>
    %175 = arith.maximumf %173, %174 : vector<16x128xf32>
    %176 = arith.truncf %175 : vector<16x128xf32> to vector<16x128xbf16>
    %c0_63 = arith.constant 0 : index
    %c0_64 = arith.constant 0 : index
    %c0_65 = arith.constant 0 : index
    %177 = vector.load %arg12[%c0_63, %c0_64, %c0_65] : memref<1x128x32xbf16, #tpu.memory_space<vmem>>, vector<1x128x32xbf16>
    %178 = vector.shape_cast %177 : vector<1x128x32xbf16> to vector<128x32xbf16>
    %cst_66 = arith.constant dense<0.000000e+00> : vector<16x32xf32>
    %179 = tpu.matmul %176, %178, %cst_66 {dimension_numbers = #tpu.dot_dimension_numbers<[1], [0], [0], [1], [0, 0, 1, 1], [], []>} : vector<16x128xbf16>, vector<128x32xbf16>, vector<16x32xf32> -> vector<16x32xf32>
    %c0_67 = arith.constant 0 : index
    %c0_68 = arith.constant 0 : index
    %c0_69 = arith.constant 0 : index
    %180 = vector.load %arg13[%c0_67, %c0_68, %c0_69] : memref<1x1x32xf32, #tpu.memory_space<vmem>>, vector<1x1x32xf32>
    %181 = vector.shape_cast %180 : vector<1x1x32xf32> to vector<1x32xf32>
    %182 = vector.broadcast %181 : vector<1x32xf32> to vector<16x32xf32>
    %183 = arith.addf %179, %182 : vector<16x32xf32>
    %184 = arith.addf %139, %183 : vector<16x32xf32>
    %c0_70 = arith.constant 0 : index
    %c0_71 = arith.constant 0 : index
    %185 = vector.load %arg17[%c0_70, %c0_71] : memref<16x32xf32, #tpu.memory_space<vmem>>, vector<16x32xf32>
    tpu.vector_store %arg17[%c0_70, %c0_71], %184 {strides = array<i32>} : memref<16x32xf32, #tpu.memory_space<vmem>>, vector<16x32xf32>,
    %c1_i32 = arith.constant 1 : i32
    %186 = arith.cmpi eq, %arg0, %c1_i32 : i32
    %187 = arith.extui %186 : i1 to i32
    %c0_i32_72 = arith.constant 0 : i32
    %188 = arith.cmpi ne, %187, %c0_i32_72 : i32
    scf.if %188 {
      %189 = arith.truncf %184 : vector<16x32xf32> to vector<16x32xbf16>
      %c0_73 = arith.constant 0 : index
      %c0_74 = arith.constant 0 : index
      %190 = vector.load %arg14[%c0_73, %c0_74] : memref<32x128xbf16, #tpu.memory_space<vmem>>, vector<32x128xbf16>
      %cst_75 = arith.constant dense<0.000000e+00> : vector<16x128xf32>
      %191 = tpu.matmul %189, %190, %cst_75 {dimension_numbers = #tpu.dot_dimension_numbers<[1], [0], [0], [1], [0, 0, 1, 1], [], []>} : vector<16x32xbf16>, vector<32x128xbf16>, vector<16x128xf32> -> vector<16x128xf32>
      %c0_76 = arith.constant 0 : index
      %c0_77 = arith.constant 0 : index
      %192 = vector.load %arg15[%c0_76, %c0_77] : memref<1x128xf32, #tpu.memory_space<vmem>>, vector<1x128xf32>
      %193 = vector.broadcast %192 : vector<1x128xf32> to vector<16x128xf32>
      %194 = arith.addf %191, %193 : vector<16x128xf32>
      %cst_78 = arith.constant dense<0xFF800000> : vector<16xf32>
      %195 = vector.multi_reduction <maximumf>, %194, %cst_78 [1] : vector<16x128xf32> to vector<16xf32>
      %196 = vector.shape_cast %195 : vector<16xf32> to vector<16x1xf32>
      %197 = vector.broadcast %196 : vector<16x1xf32> to vector<16x128xf32>
      %198 = arith.subf %194, %197 : vector<16x128xf32>
      %199 = math.exp %198 : vector<16x128xf32>
      %cst_79 = arith.constant dense<0.000000e+00> : vector<16xf32>
      %200 = vector.multi_reduction <add>, %199, %cst_79 [1] : vector<16x128xf32> to vector<16xf32>
      %201 = vector.shape_cast %200 : vector<16xf32> to vector<16x1xf32>
      %202 = math.log %201 : vector<16x1xf32>
      %203 = arith.addf %196, %202 : vector<16x1xf32>
      %204 = vector.broadcast %203 : vector<16x1xf32> to vector<16x128xf32>
      %205 = arith.subf %194, %204 : vector<16x128xf32>
      %c0_80 = arith.constant 0 : index
      %c0_81 = arith.constant 0 : index
      %206 = vector.load %arg16[%c0_80, %c0_81] : memref<16x128xf32, #tpu.memory_space<vmem>>, vector<16x128xf32>
      tpu.vector_store %arg16[%c0_80, %c0_81], %205 {strides = array<i32>} : memref<16x128xf32, #tpu.memory_space<vmem>>, vector<16x128xf32>,
    } else {
    }
    return
  }
  func.func @transform_0(%arg0: i32) -> (i32, i32) {
    %c0_i32 = arith.constant 0 : i32
    %c0_i32_0 = arith.constant 0 : i32
    %c0_i32_1 = arith.constant 0 : i32
    return %c0_i32, %c0_i32_0 : i32, i32
  }
  func.func @transform_1(%arg0: i32) -> (i32, i32, i32) {
    %c0_i32 = arith.constant 0 : i32
    %c0_i32_0 = arith.constant 0 : i32
    %c0_i32_1 = arith.constant 0 : i32
    return %arg0, %c0_i32, %c0_i32_0 : i32, i32, i32
  }
  func.func @transform_2(%arg0: i32) -> (i32, i32, i32) {
    %c0_i32 = arith.constant 0 : i32
    %c0_i32_0 = arith.constant 0 : i32
    %c0_i32_1 = arith.constant 0 : i32
    return %arg0, %c0_i32, %c0_i32_0 : i32, i32, i32
  }
  func.func @transform_3(%arg0: i32) -> (i32, i32, i32) {
    %c0_i32 = arith.constant 0 : i32
    %c0_i32_0 = arith.constant 0 : i32
    %c0_i32_1 = arith.constant 0 : i32
    return %arg0, %c0_i32, %c0_i32_0 : i32, i32, i32
  }
  func.func @transform_4(%arg0: i32) -> (i32, i32, i32) {
    %c0_i32 = arith.constant 0 : i32
    %c0_i32_0 = arith.constant 0 : i32
    %c0_i32_1 = arith.constant 0 : i32
    return %arg0, %c0_i32, %c0_i32_0 : i32, i32, i32
  }
  func.func @transform_5(%arg0: i32) -> (i32, i32, i32) {
    %c0_i32 = arith.constant 0 : i32
    %c0_i32_0 = arith.constant 0 : i32
    %c0_i32_1 = arith.constant 0 : i32
    return %arg0, %c0_i32, %c0_i32_0 : i32, i32, i32
  }
  func.func @transform_6(%arg0: i32) -> (i32, i32, i32) {
    %c0_i32 = arith.constant 0 : i32
    %c0_i32_0 = arith.constant 0 : i32
    %c0_i32_1 = arith.constant 0 : i32
    return %arg0, %c0_i32, %c0_i32_0 : i32, i32, i32
  }
  func.func @transform_7(%arg0: i32) -> (i32, i32, i32) {
    %c0_i32 = arith.constant 0 : i32
    %c0_i32_0 = arith.constant 0 : i32
    %c0_i32_1 = arith.constant 0 : i32
    return %arg0, %c0_i32, %c0_i32_0 : i32, i32, i32
  }
  func.func @transform_8(%arg0: i32) -> (i32, i32, i32) {
    %c0_i32 = arith.constant 0 : i32
    %c0_i32_0 = arith.constant 0 : i32
    %c0_i32_1 = arith.constant 0 : i32
    return %arg0, %c0_i32, %c0_i32_0 : i32, i32, i32
  }
  func.func @transform_9(%arg0: i32) -> (i32, i32, i32) {
    %c0_i32 = arith.constant 0 : i32
    %c0_i32_0 = arith.constant 0 : i32
    %c0_i32_1 = arith.constant 0 : i32
    return %arg0, %c0_i32, %c0_i32_0 : i32, i32, i32
  }
  func.func @transform_10(%arg0: i32) -> (i32, i32, i32) {
    %c0_i32 = arith.constant 0 : i32
    %c0_i32_0 = arith.constant 0 : i32
    %c0_i32_1 = arith.constant 0 : i32
    return %arg0, %c0_i32, %c0_i32_0 : i32, i32, i32
  }
  func.func @transform_11(%arg0: i32) -> (i32, i32, i32) {
    %c0_i32 = arith.constant 0 : i32
    %c0_i32_0 = arith.constant 0 : i32
    %c0_i32_1 = arith.constant 0 : i32
    return %arg0, %c0_i32, %c0_i32_0 : i32, i32, i32
  }
  func.func @transform_12(%arg0: i32) -> (i32, i32, i32) {
    %c0_i32 = arith.constant 0 : i32
    %c0_i32_0 = arith.constant 0 : i32
    %c0_i32_1 = arith.constant 0 : i32
    return %arg0, %c0_i32, %c0_i32_0 : i32, i32, i32
  }
  func.func @transform_13(%arg0: i32) -> (i32, i32) {
    %c0_i32 = arith.constant 0 : i32
    %c0_i32_0 = arith.constant 0 : i32
    %c0_i32_1 = arith.constant 0 : i32
    return %c0_i32, %c0_i32_0 : i32, i32
  }
  func.func @transform_14(%arg0: i32) -> (i32, i32) {
    %c0_i32 = arith.constant 0 : i32
    %c0_i32_0 = arith.constant 0 : i32
    %c0_i32_1 = arith.constant 0 : i32
    return %c0_i32, %c0_i32_0 : i32, i32
  }
  func.func @transform_15(%arg0: i32) -> (i32, i32) {
    %c0_i32 = arith.constant 0 : i32
    %c0_i32_0 = arith.constant 0 : i32
    %c0_i32_1 = arith.constant 0 : i32
    return %c0_i32, %c0_i32_0 : i32, i32
  }
}

</mosaic_0001>

<llo_original>
// kernel: mha_transformer_forward.1
$region0: #{mha_transformer_forward.1}
  #allocation0 [shape = 'u32[]', space=smem, size = 0x4, offset = 0x4, fixed_abs, tag = 'smem constant byte address 0x4 - core index']
  #allocation1 [shape = 'u32[144,128]{1,0:T(1,128)}', space=vmem, size = 0x12000, scoped, tag = 'internal scratch']
  #allocation2 [shape = 'f32[16,32]{1,0:T(8,128)}', space=vmem, size = 0x2000, scoped, tag = 'scratch operand']
  %s0 = inlined_call_operand.vmem [shape: f32[16,32], index: 0, kind: input, shape index: {}]
  %s1 = inlined_call_operand.vmem [shape: f32[2,1,32], index: 1, kind: input, shape index: {}]
  %s2 = inlined_call_operand.vmem [shape: f32[2,1,32], index: 2, kind: input, shape index: {}]
  %s3 = inlined_call_operand.vmem [shape: bf16[2,32,192], index: 3, kind: input, shape index: {}]
  %s4 = inlined_call_operand.vmem [shape: f32[2,1,192], index: 4, kind: input, shape index: {}]
  %s5 = inlined_call_operand.vmem [shape: bf16[2,64,32], index: 5, kind: input, shape index: {}]
  %s6 = inlined_call_operand.vmem [shape: f32[2,1,32], index: 6, kind: input, shape index: {}]
  %s7 = inlined_call_operand.vmem [shape: f32[2,1,32], index: 7, kind: input, shape index: {}]
  %s8 = inlined_call_operand.vmem [shape: f32[2,1,32], index: 8, kind: input, shape index: {}]
  %s9 = inlined_call_operand.vmem [shape: bf16[2,32,128], index: 9, kind: input, shape index: {}]
  %s10 = inlined_call_operand.vmem [shape: f32[2,1,128], index: 10, kind: input, shape index: {}]
  %s11 = inlined_call_operand.vmem [shape: bf16[2,128,32], index: 11, kind: input, shape index: {}]
  %s12 = inlined_call_operand.vmem [shape: f32[2,1,32], index: 12, kind: input, shape index: {}]
  %s13 = inlined_call_operand.vmem [shape: bf16[32,128], index: 13, kind: input, shape index: {}]
  %s14 = inlined_call_operand.vmem [shape: f32[1,128], index: 14, kind: input, shape index: {}]
  %s15 = inlined_call_operand.hbm [shape: f32[16,128], index: 15, kind: output, shape index: {}]
  %s16 = sld [smem:[#allocation0]]
  $region101: #{mha_transformer_forward.1} parent=0
    _
  %s18 = ssub.s32 1, %s16
  %s19 = scalar_select 0, %s18, %s16
  $region1: #{mha_transformer_forward.1} parent=0
    #allocation3 [shape = 'u8[8192]{0}', space=vmem, size = 0x2000, scoped, tag = 'output window, operand 0, single buffered']
    #allocation4 [shape = 's32[2]{0}', space=sflag, size = 0x8, scoped, tag = 'scoped memory for mha_transformer_forward.1']
    %20 = vsyncpa [#allocation4], 0
    loop: start=0, step=1, limit=4
    $region2: #{mha_transformer_forward.1} parent=1 // loop_pre_header
      _
    $region3: #{mha_transformer_forward.1} parent=1 // loop_header
      %s22 = sphi 0, %s26
      %p23 = scmp.ge.s32.totalorder %s22, 4
      %s30 = sphi 0, %s30
      %s32 = sphi 0, %s30
      %s33 = sphi 0, %s32
      %s47 = sphi 0, %s33
      %s53 = sphi 0, %s55
      %s56 = sphi 0, %s53
      %s57 = sphi 0, %s56
      %s73 = sphi 0, %s57
      %s79 = sphi 0, %s81
      %s82 = sphi 0, %s79
      %s83 = sphi 0, %s82
      %s99 = sphi 0, %s83
      %s105 = sphi 0, %s107
      %s108 = sphi 0, %s105
      %s109 = sphi 0, %s108
      %s125 = sphi 0, %s109
      %s131 = sphi 0, %s133
      %s134 = sphi 0, %s131
      %s135 = sphi 0, %s134
      %s151 = sphi 0, %s135
      %s157 = sphi 0, %s159
      %s160 = sphi 0, %s157
      %s161 = sphi 0, %s160
      %s177 = sphi 0, %s161
      %s183 = sphi 0, %s185
      %s186 = sphi 0, %s183
      %s187 = sphi 0, %s186
      %s203 = sphi 0, %s187
      %s209 = sphi 0, %s211
      %s212 = sphi 0, %s209
      %s213 = sphi 0, %s212
      %s229 = sphi 0, %s213
      %s235 = sphi 0, %s237
      %s238 = sphi 0, %s235
      %s239 = sphi 0, %s238
      %s255 = sphi 0, %s239
      %s261 = sphi 0, %s263
      %s264 = sphi 0, %s261
      %s265 = sphi 0, %s264
      %s281 = sphi 0, %s265
      %s287 = sphi 0, %s289
      %s290 = sphi 0, %s287
      %s291 = sphi 0, %s290
      %s307 = sphi 0, %s291
      %s313 = sphi 0, %s315
      %s316 = sphi 0, %s313
      %s317 = sphi 0, %s316
      %s333 = sphi 0, %s317
      %s339 = sphi 0, %s341
      %s342 = sphi 0, %s339
      %s343 = sphi 0, %s342
      %s359 = sphi 0, %s343
      %s363 = sphi 0, %s363
      %s365 = sphi 0, %s363
      %s366 = sphi 0, %s365
      %s380 = sphi 0, %s366
      %s384 = sphi 0, %s384
      %s386 = sphi 0, %s384
      %s387 = sphi 0, %s386
      %s401 = sphi 0, %s387
      %s405 = sphi 0, %s405
      %s407 = sphi 0, %s405
      %s408 = sphi 0, %s407
      %s422 = sphi 0, %s408
    $region4: #{mha_transformer_forward.1} parent=1 // loop_header_branch
      %25 = sbr.rel (%p23) target = $region8
    $region5: #{mha_transformer_forward.1} parent=1 // loop_body
      %s27 = ssub.s32 %s22, 1
      %s28 = ssub.s32 %s22, 2
      %s29 = sadd.s32 %s22, 1
      %s31 = sadd.s32 %s30, 1
      %p34 = scmp.eq.s32.totalorder %s22, 1
      %p35 = scmp.ne.s32.totalorder %s30, %s32
      %p36 = scmp.eq.s32.totalorder %s22, 0
      %p37 = por %p35, %p36
      %p38 = scmp.ne.s32.totalorder %s30, %s32
      %p39 = scmp.eq.s32.totalorder %s27, 1
      %p40 = por %p38, %p39
      %p41 = scmp.ne.s32.totalorder %s32, %s33
      %p42 = scmp.eq.s32.totalorder %s27, 0
      %p43 = por %p41, %p42
      %p44 = scmp.ne.s32.totalorder %s32, %s33
      %p45 = scmp.eq.s32.totalorder %s28, 1
      %p46 = por %p44, %p45
      %p48 = scmp.ne.s32.totalorder %s33, %s47
      %p49 = scmp.eq.s32.totalorder %s28, 0
      %p50 = por %p48, %p49
      %s51 = ssub.s32 %s22, %s29
      %p52 = scmp.eq.s32.totalorder %s51, 0
      %s54 = sadd.s32 %s53, 1
      %s55 = scalar_select %p52, %s53, %s54
      %p58 = pneg %p52
      %p59 = scmp.eq.s32.totalorder %s22, 1
      %p60 = por %p58, %p59
      %p61 = scmp.ne.s32.totalorder %s53, %s56
      %p62 = scmp.eq.s32.totalorder %s22, 0
      %p63 = por %p61, %p62
      %p64 = scmp.ne.s32.totalorder %s53, %s56
      %p65 = scmp.eq.s32.totalorder %s27, 1
      %p66 = por %p64, %p65
      %p67 = scmp.ne.s32.totalorder %s56, %s57
      %p68 = scmp.eq.s32.totalorder %s27, 0
      %p69 = por %p67, %p68
      %p70 = scmp.ne.s32.totalorder %s56, %s57
      %p71 = scmp.eq.s32.totalorder %s28, 1
      %p72 = por %p70, %p71
      %p74 = scmp.ne.s32.totalorder %s57, %s73
      %p75 = scmp.eq.s32.totalorder %s28, 0
      %p76 = por %p74, %p75
      %s77 = ssub.s32 %s22, %s29
      %p78 = scmp.eq.s32.totalorder %s77, 0
      %s80 = sadd.s32 %s79, 1
      %s81 = scalar_select %p78, %s79, %s80
      %p84 = pneg %p78
      %p85 = scmp.eq.s32.totalorder %s22, 1
      %p86 = por %p84, %p85
      %p87 = scmp.ne.s32.totalorder %s79, %s82
      %p88 = scmp.eq.s32.totalorder %s22, 0
      %p89 = por %p87, %p88
      %p90 = scmp.ne.s32.totalorder %s79, %s82
      %p91 = scmp.eq.s32.totalorder %s27, 1
      %p92 = por %p90, %p91
      %p93 = scmp.ne.s32.totalorder %s82, %s83
      %p94 = scmp.eq.s32.totalorder %s27, 0
      %p95 = por %p93, %p94
      %p96 = scmp.ne.s32.totalorder %s82, %s83
      %p97 = scmp.eq.s32.totalorder %s28, 1
      %p98 = por %p96, %p97
      %p100 = scmp.ne.s32.totalorder %s83, %s99
      %p101 = scmp.eq.s32.totalorder %s28, 0
      %p102 = por %p100, %p101
      %s103 = ssub.s32 %s22, %s29
      %p104 = scmp.eq.s32.totalorder %s103, 0
      %s106 = sadd.s32 %s105, 1
      %s107 = scalar_select %p104, %s105, %s106
      %p110 = pneg %p104
      %p111 = scmp.eq.s32.totalorder %s22, 1
      %p112 = por %p110, %p111
      %p113 = scmp.ne.s32.totalorder %s105, %s108
      %p114 = scmp.eq.s32.totalorder %s22, 0
      %p115 = por %p113, %p114
      %p116 = scmp.ne.s32.totalorder %s105, %s108
      %p117 = scmp.eq.s32.totalorder %s27, 1
      %p118 = por %p116, %p117
      %p119 = scmp.ne.s32.totalorder %s108, %s109
      %p120 = scmp.eq.s32.totalorder %s27, 0
      %p121 = por %p119, %p120
      %p122 = scmp.ne.s32.totalorder %s108, %s109
      %p123 = scmp.eq.s32.totalorder %s28, 1
      %p124 = por %p122, %p123
      %p126 = scmp.ne.s32.totalorder %s109, %s125
      %p127 = scmp.eq.s32.totalorder %s28, 0
      %p128 = por %p126, %p127
      %s129 = ssub.s32 %s22, %s29
      %p130 = scmp.eq.s32.totalorder %s129, 0
      %s132 = sadd.s32 %s131, 1
      %s133 = scalar_select %p130, %s131, %s132
      %p136 = pneg %p130
      %p137 = scmp.eq.s32.totalorder %s22, 1
      %p138 = por %p136, %p137
      %p139 = scmp.ne.s32.totalorder %s131, %s134
      %p140 = scmp.eq.s32.totalorder %s22, 0
      %p141 = por %p139, %p140
      %p142 = scmp.ne.s32.totalorder %s131, %s134
      %p143 = scmp.eq.s32.totalorder %s27, 1
      %p144 = por %p142, %p143
      %p145 = scmp.ne.s32.totalorder %s134, %s135
      %p146 = scmp.eq.s32.totalorder %s27, 0
      %p147 = por %p145, %p146
      %p148 = scmp.ne.s32.totalorder %s134, %s135
      %p149 = scmp.eq.s32.totalorder %s28, 1
      %p150 = por %p148, %p149
      %p152 = scmp.ne.s32.totalorder %s135, %s151
      %p153 = scmp.eq.s32.totalorder %s28, 0
      %p154 = por %p152, %p153
      %s155 = ssub.s32 %s22, %s29
      %p156 = scmp.eq.s32.totalorder %s155, 0
      %s158 = sadd.s32 %s157, 1
      %s159 = scalar_select %p156, %s157, %s158
      %p162 = pneg %p156
      %p163 = scmp.eq.s32.totalorder %s22, 1
      %p164 = por %p162, %p163
      %p165 = scmp.ne.s32.totalorder %s157, %s160
      %p166 = scmp.eq.s32.totalorder %s22, 0
      %p167 = por %p165, %p166
      %p168 = scmp.ne.s32.totalorder %s157, %s160
      %p169 = scmp.eq.s32.totalorder %s27, 1
      %p170 = por %p168, %p169
      %p171 = scmp.ne.s32.totalorder %s160, %s161
      %p172 = scmp.eq.s32.totalorder %s27, 0
      %p173 = por %p171, %p172
      %p174 = scmp.ne.s32.totalorder %s160, %s161
      %p175 = scmp.eq.s32.totalorder %s28, 1
      %p176 = por %p174, %p175
      %p178 = scmp.ne.s32.totalorder %s161, %s177
      %p179 = scmp.eq.s32.totalorder %s28, 0
      %p180 = por %p178, %p179
      %s181 = ssub.s32 %s22, %s29
      %p182 = scmp.eq.s32.totalorder %s181, 0
      %s184 = sadd.s32 %s183, 1
      %s185 = scalar_select %p182, %s183, %s184
      %p188 = pneg %p182
      %p189 = scmp.eq.s32.totalorder %s22, 1
      %p190 = por %p188, %p189
      %p191 = scmp.ne.s32.totalorder %s183, %s186
      %p192 = scmp.eq.s32.totalorder %s22, 0
      %p193 = por %p191, %p192
      %p194 = scmp.ne.s32.totalorder %s183, %s186
      %p195 = scmp.eq.s32.totalorder %s27, 1
      %p196 = por %p194, %p195
      %p197 = scmp.ne.s32.totalorder %s186, %s187
      %p198 = scmp.eq.s32.totalorder %s27, 0
      %p199 = por %p197, %p198
      %p200 = scmp.ne.s32.totalorder %s186, %s187
      %p201 = scmp.eq.s32.totalorder %s28, 1
      %p202 = por %p200, %p201
      %p204 = scmp.ne.s32.totalorder %s187, %s203
      %p205 = scmp.eq.s32.totalorder %s28, 0
      %p206 = por %p204, %p205
      %s207 = ssub.s32 %s22, %s29
      %p208 = scmp.eq.s32.totalorder %s207, 0
      %s210 = sadd.s32 %s209, 1
      %s211 = scalar_select %p208, %s209, %s210
      %p214 = pneg %p208
      %p215 = scmp.eq.s32.totalorder %s22, 1
      %p216 = por %p214, %p215
      %p217 = scmp.ne.s32.totalorder %s209, %s212
      %p218 = scmp.eq.s32.totalorder %s22, 0
      %p219 = por %p217, %p218
      %p220 = scmp.ne.s32.totalorder %s209, %s212
      %p221 = scmp.eq.s32.totalorder %s27, 1
      %p222 = por %p220, %p221
      %p223 = scmp.ne.s32.totalorder %s212, %s213
      %p224 = scmp.eq.s32.totalorder %s27, 0
      %p225 = por %p223, %p224
      %p226 = scmp.ne.s32.totalorder %s212, %s213
      %p227 = scmp.eq.s32.totalorder %s28, 1
      %p228 = por %p226, %p227
      %p230 = scmp.ne.s32.totalorder %s213, %s229
      %p231 = scmp.eq.s32.totalorder %s28, 0
      %p232 = por %p230, %p231
      %s233 = ssub.s32 %s22, %s29
      %p234 = scmp.eq.s32.totalorder %s233, 0
      %s236 = sadd.s32 %s235, 1
      %s237 = scalar_select %p234, %s235, %s236
      %p240 = pneg %p234
      %p241 = scmp.eq.s32.totalorder %s22, 1
      %p242 = por %p240, %p241
      %p243 = scmp.ne.s32.totalorder %s235, %s238
      %p244 = scmp.eq.s32.totalorder %s22, 0
      %p245 = por %p243, %p244
      %p246 = scmp.ne.s32.totalorder %s235, %s238
      %p247 = scmp.eq.s32.totalorder %s27, 1
      %p248 = por %p246, %p247
      %p249 = scmp.ne.s32.totalorder %s238, %s239
      %p250 = scmp.eq.s32.totalorder %s27, 0
      %p251 = por %p249, %p250
      %p252 = scmp.ne.s32.totalorder %s238, %s239
      %p253 = scmp.eq.s32.totalorder %s28, 1
      %p254 = por %p252, %p253
      %p256 = scmp.ne.s32.totalorder %s239, %s255
      %p257 = scmp.eq.s32.totalorder %s28, 0
      %p258 = por %p256, %p257
      %s259 = ssub.s32 %s22, %s29
      %p260 = scmp.eq.s32.totalorder %s259, 0
      %s262 = sadd.s32 %s261, 1
      %s263 = scalar_select %p260, %s261, %s262
      %p266 = pneg %p260
      %p267 = scmp.eq.s32.totalorder %s22, 1
      %p268 = por %p266, %p267
      %p269 = scmp.ne.s32.totalorder %s261, %s264
      %p270 = scmp.eq.s32.totalorder %s22, 0
      %p271 = por %p269, %p270
      %p272 = scmp.ne.s32.totalorder %s261, %s264
      %p273 = scmp.eq.s32.totalorder %s27, 1
      %p274 = por %p272, %p273
      %p275 = scmp.ne.s32.totalorder %s264, %s265
      %p276 = scmp.eq.s32.totalorder %s27, 0
      %p277 = por %p275, %p276
      %p278 = scmp.ne.s32.totalorder %s264, %s265
      %p279 = scmp.eq.s32.totalorder %s28, 1
      %p280 = por %p278, %p279
      %p282 = scmp.ne.s32.totalorder %s265, %s281
      %p283 = scmp.eq.s32.totalorder %s28, 0
      %p284 = por %p282, %p283
      %s285 = ssub.s32 %s22, %s29
      %p286 = scmp.eq.s32.totalorder %s285, 0
      %s288 = sadd.s32 %s287, 1
      %s289 = scalar_select %p286, %s287, %s288
      %p292 = pneg %p286
      %p293 = scmp.eq.s32.totalorder %s22, 1
      %p294 = por %p292, %p293
      %p295 = scmp.ne.s32.totalorder %s287, %s290
      %p296 = scmp.eq.s32.totalorder %s22, 0
      %p297 = por %p295, %p296
      %p298 = scmp.ne.s32.totalorder %s287, %s290
      %p299 = scmp.eq.s32.totalorder %s27, 1
      %p300 = por %p298, %p299
      %p301 = scmp.ne.s32.totalorder %s290, %s291
      %p302 = scmp.eq.s32.totalorder %s27, 0
      %p303 = por %p301, %p302
      %p304 = scmp.ne.s32.totalorder %s290, %s291
      %p305 = scmp.eq.s32.totalorder %s28, 1
      %p306 = por %p304, %p305
      %p308 = scmp.ne.s32.totalorder %s291, %s307
      %p309 = scmp.eq.s32.totalorder %s28, 0
      %p310 = por %p308, %p309
      %s311 = ssub.s32 %s22, %s29
      %p312 = scmp.eq.s32.totalorder %s311, 0
      %s314 = sadd.s32 %s313, 1
      %s315 = scalar_select %p312, %s313, %s314
      %p318 = pneg %p312
      %p319 = scmp.eq.s32.totalorder %s22, 1
      %p320 = por %p318, %p319
      %p321 = scmp.ne.s32.totalorder %s313, %s316
      %p322 = scmp.eq.s32.totalorder %s22, 0
      %p323 = por %p321, %p322
      %p324 = scmp.ne.s32.totalorder %s313, %s316
      %p325 = scmp.eq.s32.totalorder %s27, 1
      %p326 = por %p324, %p325
      %p327 = scmp.ne.s32.totalorder %s316, %s317
      %p328 = scmp.eq.s32.totalorder %s27, 0
      %p329 = por %p327, %p328
      %p330 = scmp.ne.s32.totalorder %s316, %s317
      %p331 = scmp.eq.s32.totalorder %s28, 1
      %p332 = por %p330, %p331
      %p334 = scmp.ne.s32.totalorder %s317, %s333
      %p335 = scmp.eq.s32.totalorder %s28, 0
      %p336 = por %p334, %p335
      %s337 = ssub.s32 %s22, %s29
      %p338 = scmp.eq.s32.totalorder %s337, 0
      %s340 = sadd.s32 %s339, 1
      %s341 = scalar_select %p338, %s339, %s340
      %p344 = pneg %p338
      %p345 = scmp.eq.s32.totalorder %s22, 1
      %p346 = por %p344, %p345
      %p347 = scmp.ne.s32.totalorder %s339, %s342
      %p348 = scmp.eq.s32.totalorder %s22, 0
      %p349 = por %p347, %p348
      %p350 = scmp.ne.s32.totalorder %s339, %s342
      %p351 = scmp.eq.s32.totalorder %s27, 1
      %p352 = por %p350, %p351
      %p353 = scmp.ne.s32.totalorder %s342, %s343
      %p354 = scmp.eq.s32.totalorder %s27, 0
      %p355 = por %p353, %p354
      %p356 = scmp.ne.s32.totalorder %s342, %s343
      %p357 = scmp.eq.s32.totalorder %s28, 1
      %p358 = por %p356, %p357
      %p360 = scmp.ne.s32.totalorder %s343, %s359
      %p361 = scmp.eq.s32.totalorder %s28, 0
      %p362 = por %p360, %p361
      %s364 = sadd.s32 %s363, 1
      %p367 = scmp.eq.s32.totalorder %s22, 1
      %p368 = scmp.ne.s32.totalorder %s363, %s365
      %p369 = scmp.eq.s32.totalorder %s22, 0
      %p370 = por %p368, %p369
      %p371 = scmp.ne.s32.totalorder %s363, %s365
      %p372 = scmp.eq.s32.totalorder %s27, 1
      %p373 = por %p371, %p372
      %p374 = scmp.ne.s32.totalorder %s365, %s366
      %p375 = scmp.eq.s32.totalorder %s27, 0
      %p376 = por %p374, %p375
      %p377 = scmp.ne.s32.totalorder %s365, %s366
      %p378 = scmp.eq.s32.totalorder %s28, 1
      %p379 = por %p377, %p378
      %p381 = scmp.ne.s32.totalorder %s366, %s380
      %p382 = scmp.eq.s32.totalorder %s28, 0
      %p383 = por %p381, %p382
      %s385 = sadd.s32 %s384, 1
      %p388 = scmp.eq.s32.totalorder %s22, 1
      %p389 = scmp.ne.s32.totalorder %s384, %s386
      %p390 = scmp.eq.s32.totalorder %s22, 0
      %p391 = por %p389, %p390
      %p392 = scmp.ne.s32.totalorder %s384, %s386
      %p393 = scmp.eq.s32.totalorder %s27, 1
      %p394 = por %p392, %p393
      %p395 = scmp.ne.s32.totalorder %s386, %s387
      %p396 = scmp.eq.s32.totalorder %s27, 0
      %p397 = por %p395, %p396
      %p398 = scmp.ne.s32.totalorder %s386, %s387
      %p399 = scmp.eq.s32.totalorder %s28, 1
      %p400 = por %p398, %p399
      %p402 = scmp.ne.s32.totalorder %s387, %s401
      %p403 = scmp.eq.s32.totalorder %s28, 0
      %p404 = por %p402, %p403
      %s406 = sadd.s32 %s405, 1
      %p409 = scmp.eq.s32.totalorder %s22, 1
      %p410 = scmp.ne.s32.totalorder %s405, %s407
      %p411 = scmp.eq.s32.totalorder %s22, 0
      %p412 = por %p410, %p411
      %p413 = scmp.ne.s32.totalorder %s405, %s407
      %p414 = scmp.eq.s32.totalorder %s27, 1
      %p415 = por %p413, %p414
      %p416 = scmp.ne.s32.totalorder %s407, %s408
      %p417 = scmp.eq.s32.totalorder %s27, 0
      %p418 = por %p416, %p417
      %p419 = scmp.ne.s32.totalorder %s407, %s408
      %p420 = scmp.eq.s32.totalorder %s28, 1
      %p421 = por %p419, %p420
      %p423 = scmp.ne.s32.totalorder %s408, %s422
      %p424 = scmp.eq.s32.totalorder %s28, 0
      %p425 = por %p423, %p424
      %p426 = scmp.le.s32.totalorder 1, %s22
      %p427 = scmp.lt.s32.totalorder %s22, 3
      %p428 = pnand %p426, %p427
      %p429 = pneg %p428
      // Predicated region
      $region9: #{mha_transformer_forward.1} parent=5 // pred_check
        _
      $region10: #{mha_transformer_forward.1} parent=5 // pred_check_branch
        %431 = sbr.rel (%p428) target = $region12
      $region11: #{mha_transformer_forward.1} parent=5 // pred_region
        %s432 = ssub.s32 %s22, 1
        // Predicated region
        $region13: #{mha_transformer_forward.1} parent=11 // pred_check
          %p433 = pneg %p43
        $region14: #{mha_transformer_forward.1} parent=11 // pred_check_branch
          %435 = sbr.rel (%p433) target = $region16
        $region15: #{mha_transformer_forward.1} parent=11 // pred_region
          _
        $region16: #{mha_transformer_forward.1} parent=11 // pred_fallthru
          _
        // Predicated region
        $region17: #{mha_transformer_forward.1} parent=11 // pred_check
          %p436 = pneg %p376
        $region18: #{mha_transformer_forward.1} parent=11 // pred_check_branch
          %438 = sbr.rel (%p436) target = $region20
        $region19: #{mha_transformer_forward.1} parent=11 // pred_region
          _
        $region20: #{mha_transformer_forward.1} parent=11 // pred_fallthru
          _
        // Predicated region
        $region21: #{mha_transformer_forward.1} parent=11 // pred_check
          %p439 = pneg %p397
        $region22: #{mha_transformer_forward.1} parent=11 // pred_check_branch
          %441 = sbr.rel (%p439) target = $region24
        $region23: #{mha_transformer_forward.1} parent=11 // pred_region
          _
        $region24: #{mha_transformer_forward.1} parent=11 // pred_fallthru
          _
      $region12: #{mha_transformer_forward.1} parent=5 // pred_fallthru
        _
      %p442 = scmp.lt.s32.totalorder %s22, 2
      // Predicated region
      $region25: #{mha_transformer_forward.1} parent=5 // pred_check
        %p443 = pneg %p442
      $region26: #{mha_transformer_forward.1} parent=5 // pred_check_branch
        %445 = sbr.rel (%p443) target = $region28
      $region27: #{mha_transformer_forward.1} parent=5 // pred_region
        // Predicated region
        $region29: #{mha_transformer_forward.1} parent=27 // pred_check
          %p446 = pneg %p63
        $region30: #{mha_transformer_forward.1} parent=27 // pred_check_branch
          %448 = sbr.rel (%p446) target = $region32
        $region31: #{mha_transformer_forward.1} parent=27 // pred_region
          %p449 = scmp.lt.s32.totalorder %s22, 1
          %s450 = scalar_select %p449, %s22, 1
          %s451 = scalar_lea.vmem %s1, %s450
        $region32: #{mha_transformer_forward.1} parent=27 // pred_fallthru
          _
        // Predicated region
        $region33: #{mha_transformer_forward.1} parent=27 // pred_check
          %p452 = pneg %p89
        $region34: #{mha_transformer_forward.1} parent=27 // pred_check_branch
          %454 = sbr.rel (%p452) target = $region36
        $region35: #{mha_transformer_forward.1} parent=27 // pred_region
          %p455 = scmp.lt.s32.totalorder %s22, 1
          %s456 = scalar_select %p455, %s22, 1
          %s457 = scalar_lea.vmem %s2, %s456
        $region36: #{mha_transformer_forward.1} parent=27 // pred_fallthru
          _
        // Predicated region
        $region37: #{mha_transformer_forward.1} parent=27 // pred_check
          %p458 = pneg %p115
        $region38: #{mha_transformer_forward.1} parent=27 // pred_check_branch
          %460 = sbr.rel (%p458) target = $region40
        $region39: #{mha_transformer_forward.1} parent=27 // pred_region
          %p461 = scmp.lt.s32.totalorder %s22, 1
          %s462 = scalar_select %p461, %s22, 1
          %s463 = smul.addr %s462, 8
          %s464 = smul.addr %s463, 4
          %s465 = scalar_lea.vmem %s3, %s464
        $region40: #{mha_transformer_forward.1} parent=27 // pred_fallthru
          _
        // Predicated region
        $region41: #{mha_transformer_forward.1} parent=27 // pred_check
          %p466 = pneg %p141
        $region42: #{mha_transformer_forward.1} parent=27 // pred_check_branch
          %468 = sbr.rel (%p466) target = $region44
        $region43: #{mha_transformer_forward.1} parent=27 // pred_region
          %p469 = scmp.lt.s32.totalorder %s22, 1
          %s470 = scalar_select %p469, %s22, 1
          %s471 = smul.addr %s470, 2
          %s472 = scalar_lea.vmem %s4, %s471
        $region44: #{mha_transformer_forward.1} parent=27 // pred_fallthru
          _
        // Predicated region
        $region45: #{mha_transformer_forward.1} parent=27 // pred_check
          %p473 = pneg %p167
        $region46: #{mha_transformer_forward.1} parent=27 // pred_check_branch
          %475 = sbr.rel (%p473) target = $region48
        $region47: #{mha_transformer_forward.1} parent=27 // pred_region
          %p476 = scmp.lt.s32.totalorder %s22, 1
          %s477 = scalar_select %p476, %s22, 1
          %s478 = smul.addr %s477, 8
          %s479 = smul.addr %s478, 4
          %s480 = scalar_lea.vmem %s5, %s479
        $region48: #{mha_transformer_forward.1} parent=27 // pred_fallthru
          _
        // Predicated region
        $region49: #{mha_transformer_forward.1} parent=27 // pred_check
          %p481 = pneg %p193
        $region50: #{mha_transformer_forward.1} parent=27 // pred_check_branch
          %483 = sbr.rel (%p481) target = $region52
        $region51: #{mha_transformer_forward.1} parent=27 // pred_region
          %p484 = scmp.lt.s32.totalorder %s22, 1
          %s485 = scalar_select %p484, %s22, 1
          %s486 = scalar_lea.vmem %s6, %s485
        $region52: #{mha_transformer_forward.1} parent=27 // pred_fallthru
          _
        // Predicated region
        $region53: #{mha_transformer_forward.1} parent=27 // pred_check
          %p487 = pneg %p219
        $region54: #{mha_transformer_forward.1} parent=27 // pred_check_branch
          %489 = sbr.rel (%p487) target = $region56
        $region55: #{mha_transformer_forward.1} parent=27 // pred_region
          %p490 = scmp.lt.s32.totalorder %s22, 1
          %s491 = scalar_select %p490, %s22, 1
          %s492 = scalar_lea.vmem %s7, %s491
        $region56: #{mha_transformer_forward.1} parent=27 // pred_fallthru
          _
        // Predicated region
        $region57: #{mha_transformer_forward.1} parent=27 // pred_check
          %p493 = pneg %p245
        $region58: #{mha_transformer_forward.1} parent=27 // pred_check_branch
          %495 = sbr.rel (%p493) target = $region60
        $region59: #{mha_transformer_forward.1} parent=27 // pred_region
          %p496 = scmp.lt.s32.totalorder %s22, 1
          %s497 = scalar_select %p496, %s22, 1
          %s498 = scalar_lea.vmem %s8, %s497
        $region60: #{mha_transformer_forward.1} parent=27 // pred_fallthru
          _
        // Predicated region
        $region61: #{mha_transformer_forward.1} parent=27 // pred_check
          %p499 = pneg %p271
        $region62: #{mha_transformer_forward.1} parent=27 // pred_check_branch
          %501 = sbr.rel (%p499) target = $region64
        $region63: #{mha_transformer_forward.1} parent=27 // pred_region
          %p502 = scmp.lt.s32.totalorder %s22, 1
          %s503 = scalar_select %p502, %s22, 1
          %s504 = smul.addr %s503, 4
          %s505 = smul.addr %s504, 4
          %s506 = scalar_lea.vmem %s9, %s505
        $region64: #{mha_transformer_forward.1} parent=27 // pred_fallthru
          _
        // Predicated region
        $region65: #{mha_transformer_forward.1} parent=27 // pred_check
          %p507 = pneg %p297
        $region66: #{mha_transformer_forward.1} parent=27 // pred_check_branch
          %509 = sbr.rel (%p507) target = $region68
        $region67: #{mha_transformer_forward.1} parent=27 // pred_region
          %p510 = scmp.lt.s32.totalorder %s22, 1
          %s511 = scalar_select %p510, %s22, 1
          %s512 = scalar_lea.vmem %s10, %s511
        $region68: #{mha_transformer_forward.1} parent=27 // pred_fallthru
          _
        // Predicated region
        $region69: #{mha_transformer_forward.1} parent=27 // pred_check
          %p513 = pneg %p323
        $region70: #{mha_transformer_forward.1} parent=27 // pred_check_branch
          %515 = sbr.rel (%p513) target = $region72
        $region71: #{mha_transformer_forward.1} parent=27 // pred_region
          %p516 = scmp.lt.s32.totalorder %s22, 1
          %s517 = scalar_select %p516, %s22, 1
          %s518 = smul.addr %s517, 16
          %s519 = smul.addr %s518, 4
          %s520 = scalar_lea.vmem %s11, %s519
        $region72: #{mha_transformer_forward.1} parent=27 // pred_fallthru
          _
        // Predicated region
        $region73: #{mha_transformer_forward.1} parent=27 // pred_check
          %p521 = pneg %p349
        $region74: #{mha_transformer_forward.1} parent=27 // pred_check_branch
          %523 = sbr.rel (%p521) target = $region76
        $region75: #{mha_transformer_forward.1} parent=27 // pred_region
          %p524 = scmp.lt.s32.totalorder %s22, 1
          %s525 = scalar_select %p524, %s22, 1
          %s526 = scalar_lea.vmem %s12, %s525
        $region76: #{mha_transformer_forward.1} parent=27 // pred_fallthru
          _
      $region28: #{mha_transformer_forward.1} parent=5 // pred_fallthru
        _
      %p527 = scmp.le.s32.totalorder 1, %s22
      %p528 = scmp.lt.s32.totalorder %s22, 3
      %p529 = pnand %p527, %p528
      %p530 = pneg %p529
      // Predicated region
      $region77: #{mha_transformer_forward.1} parent=5 // pred_check
        _
      $region78: #{mha_transformer_forward.1} parent=5 // pred_check_branch
        %532 = sbr.rel (%p529) target = $region80
      $region79: #{mha_transformer_forward.1} parent=5 // pred_region
        %s533 = ssub.s32 %s22, 1
        %p534 = pneg %p43
        %p535 = pneg %p40
        %p536 = scmp.lt.s32.totalorder %s27, 1
        %s537 = scalar_select %p536, %s27, 1
        %s538 = scalar_lea.vmem %s1, %s537
        %p539 = pneg %p69
        %p540 = pneg %p66
        %p541 = scmp.lt.s32.totalorder %s27, 1
        %s542 = scalar_select %p541, %s27, 1
        %s543 = scalar_lea.vmem %s2, %s542
        %p544 = pneg %p95
        %p545 = pneg %p92
        %p546 = scmp.lt.s32.totalorder %s27, 1
        %s547 = scalar_select %p546, %s27, 1
        %s548 = smul.addr %s547, 8
        %s549 = smul.addr %s548, 4
        %s550 = scalar_lea.vmem %s3, %s549
        %p551 = pneg %p121
        %p552 = pneg %p118
        %p553 = scmp.lt.s32.totalorder %s27, 1
        %s554 = scalar_select %p553, %s27, 1
        %s555 = smul.addr %s554, 2
        %s556 = scalar_lea.vmem %s4, %s555
        %p557 = pneg %p147
        %p558 = pneg %p144
        %p559 = scmp.lt.s32.totalorder %s27, 1
        %s560 = scalar_select %p559, %s27, 1
        %s561 = smul.addr %s560, 8
        %s562 = smul.addr %s561, 4
        %s563 = scalar_lea.vmem %s5, %s562
        %p564 = pneg %p173
        %p565 = pneg %p170
        %p566 = scmp.lt.s32.totalorder %s27, 1
        %s567 = scalar_select %p566, %s27, 1
        %s568 = scalar_lea.vmem %s6, %s567
        %p569 = pneg %p199
        %p570 = pneg %p196
        %p571 = scmp.lt.s32.totalorder %s27, 1
        %s572 = scalar_select %p571, %s27, 1
        %s573 = scalar_lea.vmem %s7, %s572
        %p574 = pneg %p225
        %p575 = pneg %p222
        %p576 = scmp.lt.s32.totalorder %s27, 1
        %s577 = scalar_select %p576, %s27, 1
        %s578 = scalar_lea.vmem %s8, %s577
        %p579 = pneg %p251
        %p580 = pneg %p248
        %p581 = scmp.lt.s32.totalorder %s27, 1
        %s582 = scalar_select %p581, %s27, 1
        %s583 = smul.addr %s582, 4
        %s584 = smul.addr %s583, 4
        %s585 = scalar_lea.vmem %s9, %s584
        %p586 = pneg %p277
        %p587 = pneg %p274
        %p588 = scmp.lt.s32.totalorder %s27, 1
        %s589 = scalar_select %p588, %s27, 1
        %s590 = scalar_lea.vmem %s10, %s589
        %p591 = pneg %p303
        %p592 = pneg %p300
        %p593 = scmp.lt.s32.totalorder %s27, 1
        %s594 = scalar_select %p593, %s27, 1
        %s595 = smul.addr %s594, 16
        %s596 = smul.addr %s595, 4
        %s597 = scalar_lea.vmem %s11, %s596
        %p598 = pneg %p329
        %p599 = pneg %p326
        %p600 = scmp.lt.s32.totalorder %s27, 1
        %s601 = scalar_select %p600, %s27, 1
        %s602 = scalar_lea.vmem %s12, %s601
        %p603 = pneg %p355
        %p604 = pneg %p352
        %p605 = pneg %p376
        %p606 = pneg %p373
        %p607 = pneg %p397
        %p608 = pneg %p394
        %p609 = pneg %p418
        %p610 = pneg %p415
        %p611 = scmp.lt.s32.totalorder %s27, 1
        %s612 = scalar_select %p611, %s27, 1
        %s613 = scalar_lea.vmem %s1, %s612
        %p614 = scmp.lt.s32.totalorder %s27, 1
        %s615 = scalar_select %p614, %s27, 1
        %s616 = scalar_lea.vmem %s2, %s615
        %p617 = scmp.lt.s32.totalorder %s27, 1
        %s618 = scalar_select %p617, %s27, 1
        %s619 = smul.addr %s618, 8
        %s620 = smul.addr %s619, 4
        %s621 = scalar_lea.vmem %s3, %s620
        %p622 = scmp.lt.s32.totalorder %s27, 1
        %s623 = scalar_select %p622, %s27, 1
        %s624 = smul.addr %s623, 2
        %s625 = scalar_lea.vmem %s4, %s624
        %p626 = scmp.lt.s32.totalorder %s27, 1
        %s627 = scalar_select %p626, %s27, 1
        %s628 = smul.addr %s627, 8
        %s629 = smul.addr %s628, 4
        %s630 = scalar_lea.vmem %s5, %s629
        %p631 = scmp.lt.s32.totalorder %s27, 1
        %s632 = scalar_select %p631, %s27, 1
        %s633 = scalar_lea.vmem %s6, %s632
        %p634 = scmp.lt.s32.totalorder %s27, 1
        %s635 = scalar_select %p634, %s27, 1
        %s636 = scalar_lea.vmem %s7, %s635
        %p637 = scmp.lt.s32.totalorder %s27, 1
        %s638 = scalar_select %p637, %s27, 1
        %s639 = scalar_lea.vmem %s8, %s638
        %p640 = scmp.lt.s32.totalorder %s27, 1
        %s641 = scalar_select %p640, %s27, 1
        %s642 = smul.addr %s641, 4
        %s643 = smul.addr %s642, 4
        %s644 = scalar_lea.vmem %s9, %s643
        %p645 = scmp.lt.s32.totalorder %s27, 1
        %s646 = scalar_select %p645, %s27, 1
        %s647 = scalar_lea.vmem %s10, %s646
        %p648 = scmp.lt.s32.totalorder %s27, 1
        %s649 = scalar_select %p648, %s27, 1
        %s650 = smul.addr %s649, 16
        %s651 = smul.addr %s650, 4
        %s652 = scalar_lea.vmem %s11, %s651
        %p653 = scmp.lt.s32.totalorder %s27, 1
        %s654 = scalar_select %p653, %s27, 1
        %s655 = scalar_lea.vmem %s12, %s654
        %p657 = scmp.eq.s32.totalorder %s27, 0
        // Predicated region
        $region81: #{mha_transformer_forward.1} parent=79 // pred_check
          %p658 = pneg %p657
        $region82: #{mha_transformer_forward.1} parent=79 // pred_check_branch
          %660 = sbr.rel (%p658) target = $region84
        $region83: #{mha_transformer_forward.1} parent=79 // pred_region
          %v661 = vld [vmem:[%s0] sm:$0xff]
          %v662 = vld [vmem:[%s0 + $0x8] sm:$0xff]
          %vm663 = vcmask 261120
          %664 = vst.msk [vmem:[#allocation2] sm:$0xff] %vm663, %v661
          %665 = vst.msk [vmem:[#allocation2 + $0x8] sm:$0xff] %vm663, %v662
        $region84: #{mha_transformer_forward.1} parent=79 // pred_fallthru
          _
        %v666 = vld [vmem:[#allocation2] sm:$0xff]
        %v667 = vld [vmem:[#allocation2 + $0x8] sm:$0xff]
        %v668 = vlaneseq
        %v669 = vshrl.u32 %v668, 7
        %v670 = vlaneseq
        %v671 = vand.u32 %v670, 127
        %vm672 = vcmp.le.s32.totalorder %v671, %v669
        %v673 = vsel %vm672, 0.0, -1e+30
        %v674 = vld [vmem:[%s613] sm:$0x1]
        %v675 = vld [vmem:[%s616] sm:$0x1]
        %vm676 = vcmask 261120
        %v677 = vsel %vm676, %v666, 0.0
        %678 = vadd.xlane.f32.xlu0 %v677
        %v679 = vpop.xlane.xlu0 %678
        %v680 = vsel %vm676, %v667, 0.0
        %681 = vadd.xlane.f32.xlu0 %v680
        %v682 = vpop.xlane.xlu0 %681
        %v683 = vrcp.pop 32.0
        %v684 = vmul.f32 %v679, %v683
        %v685 = vmul.f32 %v682, %v683
        %v686 = vsub.f32 %v666, %v684
        %v687 = vsub.f32 %v667, %v685
        %v688 = vmul.f32 %v686, %v686
        %v689 = vmul.f32 %v687, %v687
        %v690 = vsel %vm676, %v688, 0.0
        %691 = vadd.xlane.f32.xlu0 %v690
        %v692 = vpop.xlane.xlu0 %691
        %v693 = vsel %vm676, %v689, 0.0
        %694 = vadd.xlane.f32.xlu0 %v693
        %v695 = vpop.xlane.xlu0 %694
        %v696 = vmul.f32 %v692, %v683
        %v697 = vmul.f32 %v695, %v683
        %v698 = vadd.f32 %v696, 1e-05
        %v699 = vadd.f32 %v697, 1e-05
        %v700 = vrsqrt.pop %v698
        %v701 = vrsqrt.pop %v699
        %v702 = vmul.f32 %v686, %v700
        %v703 = vmul.f32 %v687, %v701
        %v705 = vlaneseq
        %v706 = vshrl.u32 %v705, 7
        %v707 = vsub.s32 0, %v706
        %v708 = vrot.slane %v674, %v707
        %v710 = vmul.f32 %v702, %v708
        %v711 = vmul.f32 %v703, %v708
        %v713 = vlaneseq
        %v714 = vshrl.u32 %v713, 7
        %v715 = vsub.s32 0, %v714
        %v716 = vrot.slane %v675, %v715
        %v718 = vadd.f32 %v710, %v716
        %v719 = vadd.f32 %v711, %v716
        %v720 = vpack.c.bf16 %v719, %v718
        %v721 = vld [vmem:[%s621] sm:$0xff]
        %v722 = vld [vmem:[%s621 + $0x8] sm:$0xff]
        %v723 = vld [vmem:[%s621 + $0x10] sm:$0xff]
        %v724 = vld [vmem:[%s621 + $0x18] sm:$0xff]
        %v725 = vld [vmem:[%s625] sm:$0x3]
        %v727 = vlaneseq
        %v728 = vshrl.u32 %v727, 7
        %v729 = vsub.s32 0, %v728
        %v730 = vrot.slane %v725, %v729
        %v731 = vlaneseq
        %v732 = vshrl.u32 %v731, 7
        %v733 = vsub.s32 1, %v732
        %v734 = vrot.slane %v725, %v733
        %v741 = vunpack.c.l.b16 %v721
        %v742 = vunpack.c.h.b16 %v721
        %v743 = vunpack.c.l.b16 %v722
        %v744 = vunpack.c.h.b16 %v722
        %v745 = vunpack.c.l.b16 %v723
        %v746 = vunpack.c.h.b16 %v723
        %v747 = vunpack.c.l.b16 %v724
        %v748 = vunpack.c.h.b16 %v724
        %v749 = vpack.c.b16 %v743, %v741
        %v750 = vpack.c.b16 %v744, %v742
        %v751 = vpack.c.b16 %v747, %v745
        %v752 = vpack.c.b16 %v748, %v746
        %v758 = vsel %vm676, %v720, 0
        %760 = vmatprep.subr.bf16.mxu0 0
        %761 = vmatpush1.bf16.msra.mxu0 0
        %762 = vmatprep.subr.bf16.mxu0 0
        %763 = vmatpush1.bf16.msra.mxu0 0
        %764 = vmatprep.subr.bf16.mxu0 0
        %765 = vmatpush1.bf16.msra.mxu0 0
        %766 = vmatprep.subr.bf16.mxu0 0
        %767 = vmatpush1.bf16.msra.mxu0 0
        %768 = vmatprep.subr.bf16.mxu0 0
        %769 = vmatpush1.bf16.msra.mxu0 0
        %770 = vmatprep.subr.bf16.mxu0 0
        %771 = vmatpush1.bf16.msra.mxu0 0
        %772 = vmatprep.subr.bf16.mxu0 %v752
        %773 = vmatpush1.bf16.msra.mxu0 %v751
        %774 = vmatprep.subr.bf16.mxu0 %v750
        %775 = vmatpush1.bf16.msra.mxu0 %v749
        %776 = vmatprep.subr.bf16.mxu0 0
        %777 = vmatpush2.bf16.msra.mxu0 0
        %778 = vmatprep.subr.bf16.mxu0 0
        %779 = vmatpush2.bf16.msra.mxu0 0
        %780 = vmatprep.subr.bf16.mxu0 0
        %781 = vmatpush2.bf16.msra.mxu0 0
        %782 = vmatprep.subr.bf16.mxu0 0
        %783 = vmatpush2.bf16.msra.mxu0 0
        %784 = vmatprep.subr.bf16.mxu0 0
        %785 = vmatpush2.bf16.msra.mxu0 0
        %786 = vmatprep.subr.bf16.mxu0 0
        %787 = vmatpush2.bf16.msra.mxu0 0
        %788 = vmatprep.subr.bf16.mxu0 0
        %789 = vmatpush2.bf16.msra.mxu0 0
        %790 = vmatprep.subr.bf16.mxu0 0
        %791 = vmatpush2.bf16.msra.mxu0 0
        %792 = vmatprep.mubr.bf16.mxu0 0
        %793 = vmatmul.mubr.bf16.gmra.mxu0 %v758
        %v794 = vpop.f32.mrf.mxu0
        %v795 = vadd.f32 %v730, %v794
        %v796 = vpop.f32.mrf.mxu0
        %v797 = vadd.f32 %v734, %v796
        %v798 = vpop.f32.mrf.mxu0
        %v799 = vadd.f32 %v730, %v798
        %v800 = vpop.f32.mrf.mxu0
        %v801 = vadd.f32 %v734, %v800
        %802 = vdwg.mxu0
        %v803 = vpack.c.bf16 %v795, %v795
        %v804 = vpack.c.bf16 %v799, %v799
        %806 = vrot.lane.b32.xlu0 %v803, 64
        %v807 = vpop.permute.xlu0 %806
        %vm808 = vcmask 130048
        %v810 = vsel %vm808, %v803, 0
        %v813 = vsel %vm808, %v807, 0
        %815 = vmatprep.subr.bf16.mxu0 0
        %816 = vmatpush1.bf16.xpose.msra.mxu0 0
        %817 = vmatprep.subr.bf16.mxu0 0
        %818 = vmatpush1.bf16.xpose.msra.mxu0 0
        %819 = vmatprep.subr.bf16.mxu0 0
        %820 = vmatpush1.bf16.xpose.msra.mxu0 0
        %821 = vmatprep.subr.bf16.mxu0 0
        %822 = vmatpush1.bf16.xpose.msra.mxu0 0
        %823 = vmatprep.subr.bf16.mxu0 0
        %824 = vmatpush1.bf16.xpose.msra.mxu0 0
        %825 = vmatprep.subr.bf16.mxu0 0
        %826 = vmatpush1.bf16.xpose.msra.mxu0 0
        %827 = vmatprep.subr.bf16.mxu0 0
        %828 = vmatpush1.bf16.xpose.msra.mxu0 0
        %829 = vmatprep.subr.bf16.mxu0 0
        %830 = vmatpush1.bf16.xpose.msra.mxu0 %v813
        %831 = vmatprep.subr.bf16.mxu0 0
        %832 = vmatpush2.bf16.xpose.msra.mxu0 0
        %833 = vmatprep.subr.bf16.mxu0 0
        %834 = vmatpush2.bf16.xpose.msra.mxu0 0
        %835 = vmatprep.subr.bf16.mxu0 0
        %836 = vmatpush2.bf16.xpose.msra.mxu0 0
        %837 = vmatprep.subr.bf16.mxu0 0
        %838 = vmatpush2.bf16.xpose.msra.mxu0 0
        %839 = vmatprep.subr.bf16.mxu0 0
        %840 = vmatpush2.bf16.xpose.msra.mxu0 0
        %841 = vmatprep.subr.bf16.mxu0 0
        %842 = vmatpush2.bf16.xpose.msra.mxu0 0
        %843 = vmatprep.subr.bf16.mxu0 0
        %844 = vmatpush2.bf16.xpose.msra.mxu0 0
        %845 = vmatprep.subr.bf16.mxu0 0
        %846 = vmatpush2.bf16.xpose.msra.mxu0 0
        %847 = vmatprep.mubr.bf16.mxu0 0
        %848 = vmatmul.mubr.bf16.gmra.mxu0 %v810
        %v849 = vpop.f32.mrf.mxu0
        %v850 = vadd.f32 %v673, %v849
        %v851 = vpop.f32.mrf.mxu0
        %v852 = vpop.f32.mrf.mxu0
        %v853 = vpop.f32.mrf.mxu0
        %854 = vdwg.mxu0
        %856 = vrot.lane.b32.xlu0 %v804, 64
        %v857 = vpop.permute.xlu0 %856
        %v859 = vsel %vm808, %v804, 0
        %v862 = vsel %vm808, %v857, 0
        %864 = vmatprep.subr.bf16.mxu0 0
        %865 = vmatpush1.bf16.xpose.msra.mxu0 0
        %866 = vmatprep.subr.bf16.mxu0 0
        %867 = vmatpush1.bf16.xpose.msra.mxu0 0
        %868 = vmatprep.subr.bf16.mxu0 0
        %869 = vmatpush1.bf16.xpose.msra.mxu0 0
        %870 = vmatprep.subr.bf16.mxu0 0
        %871 = vmatpush1.bf16.xpose.msra.mxu0 0
        %872 = vmatprep.subr.bf16.mxu0 0
        %873 = vmatpush1.bf16.xpose.msra.mxu0 0
        %874 = vmatprep.subr.bf16.mxu0 0
        %875 = vmatpush1.bf16.xpose.msra.mxu0 0
        %876 = vmatprep.subr.bf16.mxu0 0
        %877 = vmatpush1.bf16.xpose.msra.mxu0 0
        %878 = vmatprep.subr.bf16.mxu0 0
        %879 = vmatpush1.bf16.xpose.msra.mxu0 %v862
        %880 = vmatprep.subr.bf16.mxu0 0
        %881 = vmatpush2.bf16.xpose.msra.mxu0 0
        %882 = vmatprep.subr.bf16.mxu0 0
        %883 = vmatpush2.bf16.xpose.msra.mxu0 0
        %884 = vmatprep.subr.bf16.mxu0 0
        %885 = vmatpush2.bf16.xpose.msra.mxu0 0
        %886 = vmatprep.subr.bf16.mxu0 0
        %887 = vmatpush2.bf16.xpose.msra.mxu0 0
        %888 = vmatprep.subr.bf16.mxu0 0
        %889 = vmatpush2.bf16.xpose.msra.mxu0 0
        %890 = vmatprep.subr.bf16.mxu0 0
        %891 = vmatpush2.bf16.xpose.msra.mxu0 0
        %892 = vmatprep.subr.bf16.mxu0 0
        %893 = vmatpush2.bf16.xpose.msra.mxu0 0
        %894 = vmatprep.subr.bf16.mxu0 0
        %895 = vmatpush2.bf16.xpose.msra.mxu0 0
        %896 = vmatprep.mubr.bf16.mxu0 0
        %897 = vmatmul.mubr.bf16.gmra.mxu0 %v859
        %v898 = vpop.f32.mrf.mxu0
        %v899 = vadd.f32 %v673, %v898
        %v900 = vpop.f32.mrf.mxu0
        %v901 = vpop.f32.mrf.mxu0
        %v902 = vpop.f32.mrf.mxu0
        %903 = vdwg.mxu0
        %vm904 = vcmask 64512
        %v905 = vsel %vm904, %v850, -inf
        %906 = vmax.xlane.f32.xlu0 %v905
        %v907 = vpop.xlane.xlu0 %906
        %v908 = vsel %vm904, %v899, -inf
        %909 = vmax.xlane.f32.xlu0 %v908
        %v910 = vpop.xlane.xlu0 %909
        %v911 = vsub.f32 %v850, %v907
        %v912 = vsub.f32 %v899, %v910
        %v913 = vmul.f32 %v911, 1.442695
        %v914 = vpow.pop %v913
        %v915 = vmul.f32 %v912, 1.442695
        %v916 = vpow.pop %v915
        %v917 = vsel %vm904, %v914, 0.0
        %918 = vadd.xlane.f32.xlu0 %v917
        %v919 = vpop.xlane.xlu0 %918
        %v920 = vsel %vm904, %v916, 0.0
        %921 = vadd.xlane.f32.xlu0 %v920
        %v922 = vpop.xlane.xlu0 %921
        %v923 = vrcp.pop %v919
        %v924 = vmul.f32 %v914, %v923
        %v925 = vrcp.pop %v922
        %v926 = vmul.f32 %v916, %v925
        %v927 = vpack.c.bf16 %v924, %v924
        %v928 = vpack.c.bf16 %v926, %v926
        %v929 = vpack.c.bf16 %v797, %v797
        %v930 = vpack.c.bf16 %v801, %v801
        %v932 = vsel %vm904, %v927, 0
        %vm934 = vcmask 1043456
        %v936 = vsel %vm934, %v929, 0
        %938 = vmatprep.subr.bf16.mxu0 0
        %939 = vmatpush1.bf16.msra.mxu0 0
        %940 = vmatprep.subr.bf16.mxu0 0
        %941 = vmatpush1.bf16.msra.mxu0 0
        %942 = vmatprep.subr.bf16.mxu0 0
        %943 = vmatpush1.bf16.msra.mxu0 0
        %944 = vmatprep.subr.bf16.mxu0 0
        %945 = vmatpush1.bf16.msra.mxu0 0
        %946 = vmatprep.subr.bf16.mxu0 0
        %947 = vmatpush1.bf16.msra.mxu0 0
        %948 = vmatprep.subr.bf16.mxu0 0
        %949 = vmatpush1.bf16.msra.mxu0 0
        %950 = vmatprep.subr.bf16.mxu0 0
        %951 = vmatpush1.bf16.msra.mxu0 0
        %952 = vmatprep.subr.bf16.mxu0 0
        %953 = vmatpush1.bf16.msra.mxu0 %v936
        %954 = vmatprep.subr.bf16.mxu0 0
        %955 = vmatpush2.bf16.msra.mxu0 0
        %956 = vmatprep.subr.bf16.mxu0 0
        %957 = vmatpush2.bf16.msra.mxu0 0
        %958 = vmatprep.subr.bf16.mxu0 0
        %959 = vmatpush2.bf16.msra.mxu0 0
        %960 = vmatprep.subr.bf16.mxu0 0
        %961 = vmatpush2.bf16.msra.mxu0 0
        %962 = vmatprep.subr.bf16.mxu0 0
        %963 = vmatpush2.bf16.msra.mxu0 0
        %964 = vmatprep.subr.bf16.mxu0 0
        %965 = vmatpush2.bf16.msra.mxu0 0
        %966 = vmatprep.subr.bf16.mxu0 0
        %967 = vmatpush2.bf16.msra.mxu0 0
        %968 = vmatprep.subr.bf16.mxu0 0
        %969 = vmatpush2.bf16.msra.mxu0 0
        %970 = vmatprep.mubr.bf16.mxu0 0
        %971 = vmatmul.mubr.bf16.gmra.mxu0 %v932
        %v972 = vpop.f32.mrf.mxu0
        %v973 = vadd.f32 0.0, %v972
        %v974 = vpop.f32.mrf.mxu0
        %v975 = vpop.f32.mrf.mxu0
        %v976 = vpop.f32.mrf.mxu0
        %977 = vdwg.mxu0
        %v979 = vsel %vm904, %v928, 0
        %v982 = vsel %vm934, %v930, 0
        %984 = vmatprep.subr.bf16.mxu0 0
        %985 = vmatpush1.bf16.msra.mxu0 0
        %986 = vmatprep.subr.bf16.mxu0 0
        %987 = vmatpush1.bf16.msra.mxu0 0
        %988 = vmatprep.subr.bf16.mxu0 0
        %989 = vmatpush1.bf16.msra.mxu0 0
        %990 = vmatprep.subr.bf16.mxu0 0
        %991 = vmatpush1.bf16.msra.mxu0 0
        %992 = vmatprep.subr.bf16.mxu0 0
        %993 = vmatpush1.bf16.msra.mxu0 0
        %994 = vmatprep.subr.bf16.mxu0 0
        %995 = vmatpush1.bf16.msra.mxu0 0
        %996 = vmatprep.subr.bf16.mxu0 0
        %997 = vmatpush1.bf16.msra.mxu0 0
        %998 = vmatprep.subr.bf16.mxu0 0
        %999 = vmatpush1.bf16.msra.mxu0 %v982
        %1000 = vmatprep.subr.bf16.mxu0 0
        %1001 = vmatpush2.bf16.msra.mxu0 0
        %1002 = vmatprep.subr.bf16.mxu0 0
        %1003 = vmatpush2.bf16.msra.mxu0 0
        %1004 = vmatprep.subr.bf16.mxu0 0
        %1005 = vmatpush2.bf16.msra.mxu0 0
        %1006 = vmatprep.subr.bf16.mxu0 0
        %1007 = vmatpush2.bf16.msra.mxu0 0
        %1008 = vmatprep.subr.bf16.mxu0 0
        %1009 = vmatpush2.bf16.msra.mxu0 0
        %1010 = vmatprep.subr.bf16.mxu0 0
        %1011 = vmatpush2.bf16.msra.mxu0 0
        %1012 = vmatprep.subr.bf16.mxu0 0
        %1013 = vmatpush2.bf16.msra.mxu0 0
        %1014 = vmatprep.subr.bf16.mxu0 0
        %1015 = vmatpush2.bf16.msra.mxu0 0
        %1016 = vmatprep.mubr.bf16.mxu0 0
        %1017 = vmatmul.mubr.bf16.gmra.mxu0 %v979
        %v1018 = vpop.f32.mrf.mxu0
        %v1019 = vadd.f32 0.0, %v1018
        %v1020 = vpop.f32.mrf.mxu0
        %v1021 = vpop.f32.mrf.mxu0
        %v1022 = vpop.f32.mrf.mxu0
        %1023 = vdwg.mxu0
        %1024 = vrot.lane.b32.xlu0 %v803, 112
        %v1025 = vpop.permute.xlu0 %1024
        %1026 = vrot.lane.b32.xlu0 %v803, 48
        %v1027 = vpop.permute.xlu0 %1026
        %v1029 = vsel %vm808, %v1025, 0
        %v1032 = vsel %vm808, %v1027, 0
        %1034 = vmatprep.subr.bf16.mxu0 0
        %1035 = vmatpush1.bf16.xpose.msra.mxu0 0
        %1036 = vmatprep.subr.bf16.mxu0 0
        %1037 = vmatpush1.bf16.xpose.msra.mxu0 0
        %1038 = vmatprep.subr.bf16.mxu0 0
        %1039 = vmatpush1.bf16.xpose.msra.mxu0 0
        %1040 = vmatprep.subr.bf16.mxu0 0
        %1041 = vmatpush1.bf16.xpose.msra.mxu0 0
        %1042 = vmatprep.subr.bf16.mxu0 0
        %1043 = vmatpush1.bf16.xpose.msra.mxu0 0
        %1044 = vmatprep.subr.bf16.mxu0 0
        %1045 = vmatpush1.bf16.xpose.msra.mxu0 0
        %1046 = vmatprep.subr.bf16.mxu0 0
        %1047 = vmatpush1.bf16.xpose.msra.mxu0 0
        %1048 = vmatprep.subr.bf16.mxu0 0
        %1049 = vmatpush1.bf16.xpose.msra.mxu0 %v1032
        %1050 = vmatprep.subr.bf16.mxu0 0
        %1051 = vmatpush2.bf16.xpose.msra.mxu0 0
        %1052 = vmatprep.subr.bf16.mxu0 0
        %1053 = vmatpush2.bf16.xpose.msra.mxu0 0
        %1054 = vmatprep.subr.bf16.mxu0 0
        %1055 = vmatpush2.bf16.xpose.msra.mxu0 0
        %1056 = vmatprep.subr.bf16.mxu0 0
        %1057 = vmatpush2.bf16.xpose.msra.mxu0 0
        %1058 = vmatprep.subr.bf16.mxu0 0
        %1059 = vmatpush2.bf16.xpose.msra.mxu0 0
        %1060 = vmatprep.subr.bf16.mxu0 0
        %1061 = vmatpush2.bf16.xpose.msra.mxu0 0
        %1062 = vmatprep.subr.bf16.mxu0 0
        %1063 = vmatpush2.bf16.xpose.msra.mxu0 0
        %1064 = vmatprep.subr.bf16.mxu0 0
        %1065 = vmatpush2.bf16.xpose.msra.mxu0 0
        %1066 = vmatprep.mubr.bf16.mxu0 0
        %1067 = vmatmul.mubr.bf16.gmra.mxu0 %v1029
        %v1068 = vpop.f32.mrf.mxu0
        %v1069 = vadd.f32 %v673, %v1068
        %v1070 = vpop.f32.mrf.mxu0
        %v1071 = vpop.f32.mrf.mxu0
        %v1072 = vpop.f32.mrf.mxu0
        %1073 = vdwg.mxu0
        %1074 = vrot.lane.b32.xlu0 %v804, 112
        %v1075 = vpop.permute.xlu0 %1074
        %1076 = vrot.lane.b32.xlu0 %v804, 48
        %v1077 = vpop.permute.xlu0 %1076
        %v1079 = vsel %vm808, %v1075, 0
        %v1082 = vsel %vm808, %v1077, 0
        %1084 = vmatprep.subr.bf16.mxu0 0
        %1085 = vmatpush1.bf16.xpose.msra.mxu0 0
        %1086 = vmatprep.subr.bf16.mxu0 0
        %1087 = vmatpush1.bf16.xpose.msra.mxu0 0
        %1088 = vmatprep.subr.bf16.mxu0 0
        %1089 = vmatpush1.bf16.xpose.msra.mxu0 0
        %1090 = vmatprep.subr.bf16.mxu0 0
        %1091 = vmatpush1.bf16.xpose.msra.mxu0 0
        %1092 = vmatprep.subr.bf16.mxu0 0
        %1093 = vmatpush1.bf16.xpose.msra.mxu0 0
        %1094 = vmatprep.subr.bf16.mxu0 0
        %1095 = vmatpush1.bf16.xpose.msra.mxu0 0
        %1096 = vmatprep.subr.bf16.mxu0 0
        %1097 = vmatpush1.bf16.xpose.msra.mxu0 0
        %1098 = vmatprep.subr.bf16.mxu0 0
        %1099 = vmatpush1.bf16.xpose.msra.mxu0 %v1082
        %1100 = vmatprep.subr.bf16.mxu0 0
        %1101 = vmatpush2.bf16.xpose.msra.mxu0 0
        %1102 = vmatprep.subr.bf16.mxu0 0
        %1103 = vmatpush2.bf16.xpose.msra.mxu0 0
        %1104 = vmatprep.subr.bf16.mxu0 0
        %1105 = vmatpush2.bf16.xpose.msra.mxu0 0
        %1106 = vmatprep.subr.bf16.mxu0 0
        %1107 = vmatpush2.bf16.xpose.msra.mxu0 0
        %1108 = vmatprep.subr.bf16.mxu0 0
        %1109 = vmatpush2.bf16.xpose.msra.mxu0 0
        %1110 = vmatprep.subr.bf16.mxu0 0
        %1111 = vmatpush2.bf16.xpose.msra.mxu0 0
        %1112 = vmatprep.subr.bf16.mxu0 0
        %1113 = vmatpush2.bf16.xpose.msra.mxu0 0
        %1114 = vmatprep.subr.bf16.mxu0 0
        %1115 = vmatpush2.bf16.xpose.msra.mxu0 0
        %1116 = vmatprep.mubr.bf16.mxu0 0
        %1117 = vmatmul.mubr.bf16.gmra.mxu0 %v1079
        %v1118 = vpop.f32.mrf.mxu0
        %v1119 = vadd.f32 %v673, %v1118
        %v1120 = vpop.f32.mrf.mxu0
        %v1121 = vpop.f32.mrf.mxu0
        %v1122 = vpop.f32.mrf.mxu0
        %1123 = vdwg.mxu0
        %v1124 = vsel %vm904, %v1069, -inf
        %1125 = vmax.xlane.f32.xlu0 %v1124
        %v1126 = vpop.xlane.xlu0 %1125
        %v1127 = vsel %vm904, %v1119, -inf
        %1128 = vmax.xlane.f32.xlu0 %v1127
        %v1129 = vpop.xlane.xlu0 %1128
        %v1130 = vsub.f32 %v1069, %v1126
        %v1131 = vsub.f32 %v1119, %v1129
        %v1132 = vmul.f32 %v1130, 1.442695
        %v1133 = vpow.pop %v1132
        %v1134 = vmul.f32 %v1131, 1.442695
        %v1135 = vpow.pop %v1134
        %v1136 = vsel %vm904, %v1133, 0.0
        %1137 = vadd.xlane.f32.xlu0 %v1136
        %v1138 = vpop.xlane.xlu0 %1137
        %v1139 = vsel %vm904, %v1135, 0.0
        %1140 = vadd.xlane.f32.xlu0 %v1139
        %v1141 = vpop.xlane.xlu0 %1140
        %v1142 = vrcp.pop %v1138
        %v1143 = vmul.f32 %v1133, %v1142
        %v1144 = vrcp.pop %v1141
        %v1145 = vmul.f32 %v1135, %v1144
        %v1146 = vpack.c.bf16 %v1143, %v1143
        %v1147 = vpack.c.bf16 %v1145, %v1145
        %1149 = vrot.lane.b32.xlu0 %v929, 112
        %v1150 = vpop.permute.xlu0 %1149
        %v1152 = vsel %vm904, %v1146, 0
        %v1155 = vsel %vm934, %v1150, 0
        %1157 = vmatprep.subr.bf16.mxu0 0
        %1158 = vmatpush1.bf16.msra.mxu0 0
        %1159 = vmatprep.subr.bf16.mxu0 0
        %1160 = vmatpush1.bf16.msra.mxu0 0
        %1161 = vmatprep.subr.bf16.mxu0 0
        %1162 = vmatpush1.bf16.msra.mxu0 0
        %1163 = vmatprep.subr.bf16.mxu0 0
        %1164 = vmatpush1.bf16.msra.mxu0 0
        %1165 = vmatprep.subr.bf16.mxu0 0
        %1166 = vmatpush1.bf16.msra.mxu0 0
        %1167 = vmatprep.subr.bf16.mxu0 0
        %1168 = vmatpush1.bf16.msra.mxu0 0
        %1169 = vmatprep.subr.bf16.mxu0 0
        %1170 = vmatpush1.bf16.msra.mxu0 0
        %1171 = vmatprep.subr.bf16.mxu0 0
        %1172 = vmatpush1.bf16.msra.mxu0 %v1155
        %1173 = vmatprep.subr.bf16.mxu0 0
        %1174 = vmatpush2.bf16.msra.mxu0 0
        %1175 = vmatprep.subr.bf16.mxu0 0
        %1176 = vmatpush2.bf16.msra.mxu0 0
        %1177 = vmatprep.subr.bf16.mxu0 0
        %1178 = vmatpush2.bf16.msra.mxu0 0
        %1179 = vmatprep.subr.bf16.mxu0 0
        %1180 = vmatpush2.bf16.msra.mxu0 0
        %1181 = vmatprep.subr.bf16.mxu0 0
        %1182 = vmatpush2.bf16.msra.mxu0 0
        %1183 = vmatprep.subr.bf16.mxu0 0
        %1184 = vmatpush2.bf16.msra.mxu0 0
        %1185 = vmatprep.subr.bf16.mxu0 0
        %1186 = vmatpush2.bf16.msra.mxu0 0
        %1187 = vmatprep.subr.bf16.mxu0 0
        %1188 = vmatpush2.bf16.msra.mxu0 0
        %1189 = vmatprep.mubr.bf16.mxu0 0
        %1190 = vmatmul.mubr.bf16.gmra.mxu0 %v1152
        %v1191 = vpop.f32.mrf.mxu0
        %v1192 = vadd.f32 0.0, %v1191
        %v1193 = vpop.f32.mrf.mxu0
        %v1194 = vpop.f32.mrf.mxu0
        %v1195 = vpop.f32.mrf.mxu0
        %1196 = vdwg.mxu0
        %1198 = vrot.lane.b32.xlu0 %v930, 112
        %v1199 = vpop.permute.xlu0 %1198
        %v1201 = vsel %vm904, %v1147, 0
        %v1204 = vsel %vm934, %v1199, 0
        %1206 = vmatprep.subr.bf16.mxu0 0
        %1207 = vmatpush1.bf16.msra.mxu0 0
        %1208 = vmatprep.subr.bf16.mxu0 0
        %1209 = vmatpush1.bf16.msra.mxu0 0
        %1210 = vmatprep.subr.bf16.mxu0 0
        %1211 = vmatpush1.bf16.msra.mxu0 0
        %1212 = vmatprep.subr.bf16.mxu0 0
        %1213 = vmatpush1.bf16.msra.mxu0 0
        %1214 = vmatprep.subr.bf16.mxu0 0
        %1215 = vmatpush1.bf16.msra.mxu0 0
        %1216 = vmatprep.subr.bf16.mxu0 0
        %1217 = vmatpush1.bf16.msra.mxu0 0
        %1218 = vmatprep.subr.bf16.mxu0 0
        %1219 = vmatpush1.bf16.msra.mxu0 0
        %1220 = vmatprep.subr.bf16.mxu0 0
        %1221 = vmatpush1.bf16.msra.mxu0 %v1204
        %1222 = vmatprep.subr.bf16.mxu0 0
        %1223 = vmatpush2.bf16.msra.mxu0 0
        %1224 = vmatprep.subr.bf16.mxu0 0
        %1225 = vmatpush2.bf16.msra.mxu0 0
        %1226 = vmatprep.subr.bf16.mxu0 0
        %1227 = vmatpush2.bf16.msra.mxu0 0
        %1228 = vmatprep.subr.bf16.mxu0 0
        %1229 = vmatpush2.bf16.msra.mxu0 0
        %1230 = vmatprep.subr.bf16.mxu0 0
        %1231 = vmatpush2.bf16.msra.mxu0 0
        %1232 = vmatprep.subr.bf16.mxu0 0
        %1233 = vmatpush2.bf16.msra.mxu0 0
        %1234 = vmatprep.subr.bf16.mxu0 0
        %1235 = vmatpush2.bf16.msra.mxu0 0
        %1236 = vmatprep.subr.bf16.mxu0 0
        %1237 = vmatpush2.bf16.msra.mxu0 0
        %1238 = vmatprep.mubr.bf16.mxu0 0
        %1239 = vmatmul.mubr.bf16.gmra.mxu0 %v1201
        %v1240 = vpop.f32.mrf.mxu0
        %v1241 = vadd.f32 0.0, %v1240
        %v1242 = vpop.f32.mrf.mxu0
        %v1243 = vpop.f32.mrf.mxu0
        %v1244 = vpop.f32.mrf.mxu0
        %1245 = vdwg.mxu0
        %1246 = vrot.lane.b32.xlu0 %v803, 96
        %v1247 = vpop.permute.xlu0 %1246
        %1248 = vrot.lane.b32.xlu0 %v803, 32
        %v1249 = vpop.permute.xlu0 %1248
        %v1251 = vsel %vm808, %v1247, 0
        %v1254 = vsel %vm808, %v1249, 0
        %1256 = vmatprep.subr.bf16.mxu0 0
        %1257 = vmatpush1.bf16.xpose.msra.mxu0 0
        %1258 = vmatprep.subr.bf16.mxu0 0
        %1259 = vmatpush1.bf16.xpose.msra.mxu0 0
        %1260 = vmatprep.subr.bf16.mxu0 0
        %1261 = vmatpush1.bf16.xpose.msra.mxu0 0
        %1262 = vmatprep.subr.bf16.mxu0 0
        %1263 = vmatpush1.bf16.xpose.msra.mxu0 0
        %1264 = vmatprep.subr.bf16.mxu0 0
        %1265 = vmatpush1.bf16.xpose.msra.mxu0 0
        %1266 = vmatprep.subr.bf16.mxu0 0
        %1267 = vmatpush1.bf16.xpose.msra.mxu0 0
        %1268 = vmatprep.subr.bf16.mxu0 0
        %1269 = vmatpush1.bf16.xpose.msra.mxu0 0
        %1270 = vmatprep.subr.bf16.mxu0 0
        %1271 = vmatpush1.bf16.xpose.msra.mxu0 %v1254
        %1272 = vmatprep.subr.bf16.mxu0 0
        %1273 = vmatpush2.bf16.xpose.msra.mxu0 0
        %1274 = vmatprep.subr.bf16.mxu0 0
        %1275 = vmatpush2.bf16.xpose.msra.mxu0 0
        %1276 = vmatprep.subr.bf16.mxu0 0
        %1277 = vmatpush2.bf16.xpose.msra.mxu0 0
        %1278 = vmatprep.subr.bf16.mxu0 0
        %1279 = vmatpush2.bf16.xpose.msra.mxu0 0
        %1280 = vmatprep.subr.bf16.mxu0 0
        %1281 = vmatpush2.bf16.xpose.msra.mxu0 0
        %1282 = vmatprep.subr.bf16.mxu0 0
        %1283 = vmatpush2.bf16.xpose.msra.mxu0 0
        %1284 = vmatprep.subr.bf16.mxu0 0
        %1285 = vmatpush2.bf16.xpose.msra.mxu0 0
        %1286 = vmatprep.subr.bf16.mxu0 0
        %1287 = vmatpush2.bf16.xpose.msra.mxu0 0
        %1288 = vmatprep.mubr.bf16.mxu0 0
        %1289 = vmatmul.mubr.bf16.gmra.mxu0 %v1251
        %v1290 = vpop.f32.mrf.mxu0
        %v1291 = vadd.f32 %v673, %v1290
        %v1292 = vpop.f32.mrf.mxu0
        %v1293 = vpop.f32.mrf.mxu0
        %v1294 = vpop.f32.mrf.mxu0
        %1295 = vdwg.mxu0
        %1296 = vrot.lane.b32.xlu0 %v804, 96
        %v1297 = vpop.permute.xlu0 %1296
        %1298 = vrot.lane.b32.xlu0 %v804, 32
        %v1299 = vpop.permute.xlu0 %1298
        %v1301 = vsel %vm808, %v1297, 0
        %v1304 = vsel %vm808, %v1299, 0
        %1306 = vmatprep.subr.bf16.mxu0 0
        %1307 = vmatpush1.bf16.xpose.msra.mxu0 0
        %1308 = vmatprep.subr.bf16.mxu0 0
        %1309 = vmatpush1.bf16.xpose.msra.mxu0 0
        %1310 = vmatprep.subr.bf16.mxu0 0
        %1311 = vmatpush1.bf16.xpose.msra.mxu0 0
        %1312 = vmatprep.subr.bf16.mxu0 0
        %1313 = vmatpush1.bf16.xpose.msra.mxu0 0
        %1314 = vmatprep.subr.bf16.mxu0 0
        %1315 = vmatpush1.bf16.xpose.msra.mxu0 0
        %1316 = vmatprep.subr.bf16.mxu0 0
        %1317 = vmatpush1.bf16.xpose.msra.mxu0 0
        %1318 = vmatprep.subr.bf16.mxu0 0
        %1319 = vmatpush1.bf16.xpose.msra.mxu0 0
        %1320 = vmatprep.subr.bf16.mxu0 0
        %1321 = vmatpush1.bf16.xpose.msra.mxu0 %v1304
        %1322 = vmatprep.subr.bf16.mxu0 0
        %1323 = vmatpush2.bf16.xpose.msra.mxu0 0
        %1324 = vmatprep.subr.bf16.mxu0 0
        %1325 = vmatpush2.bf16.xpose.msra.mxu0 0
        %1326 = vmatprep.subr.bf16.mxu0 0
        %1327 = vmatpush2.bf16.xpose.msra.mxu0 0
        %1328 = vmatprep.subr.bf16.mxu0 0
        %1329 = vmatpush2.bf16.xpose.msra.mxu0 0
        %1330 = vmatprep.subr.bf16.mxu0 0
        %1331 = vmatpush2.bf16.xpose.msra.mxu0 0
        %1332 = vmatprep.subr.bf16.mxu0 0
        %1333 = vmatpush2.bf16.xpose.msra.mxu0 0
        %1334 = vmatprep.subr.bf16.mxu0 0
        %1335 = vmatpush2.bf16.xpose.msra.mxu0 0
        %1336 = vmatprep.subr.bf16.mxu0 0
        %1337 = vmatpush2.bf16.xpose.msra.mxu0 0
        %1338 = vmatprep.mubr.bf16.mxu0 0
        %1339 = vmatmul.mubr.bf16.gmra.mxu0 %v1301
        %v1340 = vpop.f32.mrf.mxu0
        %v1341 = vadd.f32 %v673, %v1340
        %v1342 = vpop.f32.mrf.mxu0
        %v1343 = vpop.f32.mrf.mxu0
        %v1344 = vpop.f32.mrf.mxu0
        %1345 = vdwg.mxu0
        %v1346 = vsel %vm904, %v1291, -inf
        %1347 = vmax.xlane.f32.xlu0 %v1346
        %v1348 = vpop.xlane.xlu0 %1347
        %v1349 = vsel %vm904, %v1341, -inf
        %1350 = vmax.xlane.f32.xlu0 %v1349
        %v1351 = vpop.xlane.xlu0 %1350
        %v1352 = vsub.f32 %v1291, %v1348
        %v1353 = vsub.f32 %v1341, %v1351
        %v1354 = vmul.f32 %v1352, 1.442695
        %v1355 = vpow.pop %v1354
        %v1356 = vmul.f32 %v1353, 1.442695
        %v1357 = vpow.pop %v1356
        %v1358 = vsel %vm904, %v1355, 0.0
        %1359 = vadd.xlane.f32.xlu0 %v1358
        %v1360 = vpop.xlane.xlu0 %1359
        %v1361 = vsel %vm904, %v1357, 0.0
        %1362 = vadd.xlane.f32.xlu0 %v1361
        %v1363 = vpop.xlane.xlu0 %1362
        %v1364 = vrcp.pop %v1360
        %v1365 = vmul.f32 %v1355, %v1364
        %v1366 = vrcp.pop %v1363
        %v1367 = vmul.f32 %v1357, %v1366
        %v1368 = vpack.c.bf16 %v1365, %v1365
        %v1369 = vpack.c.bf16 %v1367, %v1367
        %1370 = vrot.lane.b32.xlu0 %v929, 96
        %v1371 = vpop.permute.xlu0 %1370
        %v1373 = vsel %vm904, %v1368, 0
        %v1376 = vsel %vm934, %v1371, 0
        %1378 = vmatprep.subr.bf16.mxu0 0
        %1379 = vmatpush1.bf16.msra.mxu0 0
        %1380 = vmatprep.subr.bf16.mxu0 0
        %1381 = vmatpush1.bf16.msra.mxu0 0
        %1382 = vmatprep.subr.bf16.mxu0 0
        %1383 = vmatpush1.bf16.msra.mxu0 0
        %1384 = vmatprep.subr.bf16.mxu0 0
        %1385 = vmatpush1.bf16.msra.mxu0 0
        %1386 = vmatprep.subr.bf16.mxu0 0
        %1387 = vmatpush1.bf16.msra.mxu0 0
        %1388 = vmatprep.subr.bf16.mxu0 0
        %1389 = vmatpush1.bf16.msra.mxu0 0
        %1390 = vmatprep.subr.bf16.mxu0 0
        %1391 = vmatpush1.bf16.msra.mxu0 0
        %1392 = vmatprep.subr.bf16.mxu0 0
        %1393 = vmatpush1.bf16.msra.mxu0 %v1376
        %1394 = vmatprep.subr.bf16.mxu0 0
        %1395 = vmatpush2.bf16.msra.mxu0 0
        %1396 = vmatprep.subr.bf16.mxu0 0
        %1397 = vmatpush2.bf16.msra.mxu0 0
        %1398 = vmatprep.subr.bf16.mxu0 0
        %1399 = vmatpush2.bf16.msra.mxu0 0
        %1400 = vmatprep.subr.bf16.mxu0 0
        %1401 = vmatpush2.bf16.msra.mxu0 0
        %1402 = vmatprep.subr.bf16.mxu0 0
        %1403 = vmatpush2.bf16.msra.mxu0 0
        %1404 = vmatprep.subr.bf16.mxu0 0
        %1405 = vmatpush2.bf16.msra.mxu0 0
        %1406 = vmatprep.subr.bf16.mxu0 0
        %1407 = vmatpush2.bf16.msra.mxu0 0
        %1408 = vmatprep.subr.bf16.mxu0 0
        %1409 = vmatpush2.bf16.msra.mxu0 0
        %1410 = vmatprep.mubr.bf16.mxu0 0
        %1411 = vmatmul.mubr.bf16.gmra.mxu0 %v1373
        %v1412 = vpop.f32.mrf.mxu0
        %v1413 = vadd.f32 0.0, %v1412
        %v1414 = vpop.f32.mrf.mxu0
        %v1415 = vpop.f32.mrf.mxu0
        %v1416 = vpop.f32.mrf.mxu0
        %1417 = vdwg.mxu0
        %1418 = vrot.lane.b32.xlu0 %v930, 96
        %v1419 = vpop.permute.xlu0 %1418
        %v1421 = vsel %vm904, %v1369, 0
        %v1424 = vsel %vm934, %v1419, 0
        %1426 = vmatprep.subr.bf16.mxu0 0
        %1427 = vmatpush1.bf16.msra.mxu0 0
        %1428 = vmatprep.subr.bf16.mxu0 0
        %1429 = vmatpush1.bf16.msra.mxu0 0
        %1430 = vmatprep.subr.bf16.mxu0 0
        %1431 = vmatpush1.bf16.msra.mxu0 0
        %1432 = vmatprep.subr.bf16.mxu0 0
        %1433 = vmatpush1.bf16.msra.mxu0 0
        %1434 = vmatprep.subr.bf16.mxu0 0
        %1435 = vmatpush1.bf16.msra.mxu0 0
        %1436 = vmatprep.subr.bf16.mxu0 0
        %1437 = vmatpush1.bf16.msra.mxu0 0
        %1438 = vmatprep.subr.bf16.mxu0 0
        %1439 = vmatpush1.bf16.msra.mxu0 0
        %1440 = vmatprep.subr.bf16.mxu0 0
        %1441 = vmatpush1.bf16.msra.mxu0 %v1424
        %1442 = vmatprep.subr.bf16.mxu0 0
        %1443 = vmatpush2.bf16.msra.mxu0 0
        %1444 = vmatprep.subr.bf16.mxu0 0
        %1445 = vmatpush2.bf16.msra.mxu0 0
        %1446 = vmatprep.subr.bf16.mxu0 0
        %1447 = vmatpush2.bf16.msra.mxu0 0
        %1448 = vmatprep.subr.bf16.mxu0 0
        %1449 = vmatpush2.bf16.msra.mxu0 0
        %1450 = vmatprep.subr.bf16.mxu0 0
        %1451 = vmatpush2.bf16.msra.mxu0 0
        %1452 = vmatprep.subr.bf16.mxu0 0
        %1453 = vmatpush2.bf16.msra.mxu0 0
        %1454 = vmatprep.subr.bf16.mxu0 0
        %1455 = vmatpush2.bf16.msra.mxu0 0
        %1456 = vmatprep.subr.bf16.mxu0 0
        %1457 = vmatpush2.bf16.msra.mxu0 0
        %1458 = vmatprep.mubr.bf16.mxu0 0
        %1459 = vmatmul.mubr.bf16.gmra.mxu0 %v1421
        %v1460 = vpop.f32.mrf.mxu0
        %v1461 = vadd.f32 0.0, %v1460
        %v1462 = vpop.f32.mrf.mxu0
        %v1463 = vpop.f32.mrf.mxu0
        %v1464 = vpop.f32.mrf.mxu0
        %1465 = vdwg.mxu0
        %1466 = vrot.lane.b32.xlu0 %v803, 80
        %v1467 = vpop.permute.xlu0 %1466
        %1468 = vrot.lane.b32.xlu0 %v803, 16
        %v1469 = vpop.permute.xlu0 %1468
        %v1471 = vsel %vm808, %v1467, 0
        %v1474 = vsel %vm808, %v1469, 0
        %1476 = vmatprep.subr.bf16.mxu0 0
        %1477 = vmatpush1.bf16.xpose.msra.mxu0 0
        %1478 = vmatprep.subr.bf16.mxu0 0
        %1479 = vmatpush1.bf16.xpose.msra.mxu0 0
        %1480 = vmatprep.subr.bf16.mxu0 0
        %1481 = vmatpush1.bf16.xpose.msra.mxu0 0
        %1482 = vmatprep.subr.bf16.mxu0 0
        %1483 = vmatpush1.bf16.xpose.msra.mxu0 0
        %1484 = vmatprep.subr.bf16.mxu0 0
        %1485 = vmatpush1.bf16.xpose.msra.mxu0 0
        %1486 = vmatprep.subr.bf16.mxu0 0
        %1487 = vmatpush1.bf16.xpose.msra.mxu0 0
        %1488 = vmatprep.subr.bf16.mxu0 0
        %1489 = vmatpush1.bf16.xpose.msra.mxu0 0
        %1490 = vmatprep.subr.bf16.mxu0 0
        %1491 = vmatpush1.bf16.xpose.msra.mxu0 %v1474
        %1492 = vmatprep.subr.bf16.mxu0 0
        %1493 = vmatpush2.bf16.xpose.msra.mxu0 0
        %1494 = vmatprep.subr.bf16.mxu0 0
        %1495 = vmatpush2.bf16.xpose.msra.mxu0 0
        %1496 = vmatprep.subr.bf16.mxu0 0
        %1497 = vmatpush2.bf16.xpose.msra.mxu0 0
        %1498 = vmatprep.subr.bf16.mxu0 0
        %1499 = vmatpush2.bf16.xpose.msra.mxu0 0
        %1500 = vmatprep.subr.bf16.mxu0 0
        %1501 = vmatpush2.bf16.xpose.msra.mxu0 0
        %1502 = vmatprep.subr.bf16.mxu0 0
        %1503 = vmatpush2.bf16.xpose.msra.mxu0 0
        %1504 = vmatprep.subr.bf16.mxu0 0
        %1505 = vmatpush2.bf16.xpose.msra.mxu0 0
        %1506 = vmatprep.subr.bf16.mxu0 0
        %1507 = vmatpush2.bf16.xpose.msra.mxu0 0
        %1508 = vmatprep.mubr.bf16.mxu0 0
        %1509 = vmatmul.mubr.bf16.gmra.mxu0 %v1471
        %v1510 = vpop.f32.mrf.mxu0
        %v1511 = vadd.f32 %v673, %v1510
        %v1512 = vpop.f32.mrf.mxu0
        %v1513 = vpop.f32.mrf.mxu0
        %v1514 = vpop.f32.mrf.mxu0
        %1515 = vdwg.mxu0
        %1516 = vrot.lane.b32.xlu0 %v804, 80
        %v1517 = vpop.permute.xlu0 %1516
        %1518 = vrot.lane.b32.xlu0 %v804, 16
        %v1519 = vpop.permute.xlu0 %1518
        %v1521 = vsel %vm808, %v1517, 0
        %v1524 = vsel %vm808, %v1519, 0
        %1526 = vmatprep.subr.bf16.mxu0 0
        %1527 = vmatpush1.bf16.xpose.msra.mxu0 0
        %1528 = vmatprep.subr.bf16.mxu0 0
        %1529 = vmatpush1.bf16.xpose.msra.mxu0 0
        %1530 = vmatprep.subr.bf16.mxu0 0
        %1531 = vmatpush1.bf16.xpose.msra.mxu0 0
        %1532 = vmatprep.subr.bf16.mxu0 0
        %1533 = vmatpush1.bf16.xpose.msra.mxu0 0
        %1534 = vmatprep.subr.bf16.mxu0 0
        %1535 = vmatpush1.bf16.xpose.msra.mxu0 0
        %1536 = vmatprep.subr.bf16.mxu0 0
        %1537 = vmatpush1.bf16.xpose.msra.mxu0 0
        %1538 = vmatprep.subr.bf16.mxu0 0
        %1539 = vmatpush1.bf16.xpose.msra.mxu0 0
        %1540 = vmatprep.subr.bf16.mxu0 0
        %1541 = vmatpush1.bf16.xpose.msra.mxu0 %v1524
        %1542 = vmatprep.subr.bf16.mxu0 0
        %1543 = vmatpush2.bf16.xpose.msra.mxu0 0
        %1544 = vmatprep.subr.bf16.mxu0 0
        %1545 = vmatpush2.bf16.xpose.msra.mxu0 0
        %1546 = vmatprep.subr.bf16.mxu0 0
        %1547 = vmatpush2.bf16.xpose.msra.mxu0 0
        %1548 = vmatprep.subr.bf16.mxu0 0
        %1549 = vmatpush2.bf16.xpose.msra.mxu0 0
        %1550 = vmatprep.subr.bf16.mxu0 0
        %1551 = vmatpush2.bf16.xpose.msra.mxu0 0
        %1552 = vmatprep.subr.bf16.mxu0 0
        %1553 = vmatpush2.bf16.xpose.msra.mxu0 0
        %1554 = vmatprep.subr.bf16.mxu0 0
        %1555 = vmatpush2.bf16.xpose.msra.mxu0 0
        %1556 = vmatprep.subr.bf16.mxu0 0
        %1557 = vmatpush2.bf16.xpose.msra.mxu0 0
        %1558 = vmatprep.mubr.bf16.mxu0 0
        %1559 = vmatmul.mubr.bf16.gmra.mxu0 %v1521
        %v1560 = vpop.f32.mrf.mxu0
        %v1561 = vadd.f32 %v673, %v1560
        %v1562 = vpop.f32.mrf.mxu0
        %v1563 = vpop.f32.mrf.mxu0
        %v1564 = vpop.f32.mrf.mxu0
        %1565 = vdwg.mxu0
        %v1566 = vsel %vm904, %v1511, -inf
        %1567 = vmax.xlane.f32.xlu0 %v1566
        %v1568 = vpop.xlane.xlu0 %1567
        %v1569 = vsel %vm904, %v1561, -inf
        %1570 = vmax.xlane.f32.xlu0 %v1569
        %v1571 = vpop.xlane.xlu0 %1570
        %v1572 = vsub.f32 %v1511, %v1568
        %v1573 = vsub.f32 %v1561, %v1571
        %v1574 = vmul.f32 %v1572, 1.442695
        %v1575 = vpow.pop %v1574
        %v1576 = vmul.f32 %v1573, 1.442695
        %v1577 = vpow.pop %v1576
        %v1578 = vsel %vm904, %v1575, 0.0
        %1579 = vadd.xlane.f32.xlu0 %v1578
        %v1580 = vpop.xlane.xlu0 %1579
        %v1581 = vsel %vm904, %v1577, 0.0
        %1582 = vadd.xlane.f32.xlu0 %v1581
        %v1583 = vpop.xlane.xlu0 %1582
        %v1584 = vrcp.pop %v1580
        %v1585 = vmul.f32 %v1575, %v1584
        %v1586 = vrcp.pop %v1583
        %v1587 = vmul.f32 %v1577, %v1586
        %v1588 = vpack.c.bf16 %v1585, %v1585
        %v1589 = vpack.c.bf16 %v1587, %v1587
        %1590 = vrot.lane.b32.xlu0 %v929, 80
        %v1591 = vpop.permute.xlu0 %1590
        %v1593 = vsel %vm904, %v1588, 0
        %v1596 = vsel %vm934, %v1591, 0
        %1598 = vmatprep.subr.bf16.mxu0 0
        %1599 = vmatpush1.bf16.msra.mxu0 0
        %1600 = vmatprep.subr.bf16.mxu0 0
        %1601 = vmatpush1.bf16.msra.mxu0 0
        %1602 = vmatprep.subr.bf16.mxu0 0
        %1603 = vmatpush1.bf16.msra.mxu0 0
        %1604 = vmatprep.subr.bf16.mxu0 0
        %1605 = vmatpush1.bf16.msra.mxu0 0
        %1606 = vmatprep.subr.bf16.mxu0 0
        %1607 = vmatpush1.bf16.msra.mxu0 0
        %1608 = vmatprep.subr.bf16.mxu0 0
        %1609 = vmatpush1.bf16.msra.mxu0 0
        %1610 = vmatprep.subr.bf16.mxu0 0
        %1611 = vmatpush1.bf16.msra.mxu0 0
        %1612 = vmatprep.subr.bf16.mxu0 0
        %1613 = vmatpush1.bf16.msra.mxu0 %v1596
        %1614 = vmatprep.subr.bf16.mxu0 0
        %1615 = vmatpush2.bf16.msra.mxu0 0
        %1616 = vmatprep.subr.bf16.mxu0 0
        %1617 = vmatpush2.bf16.msra.mxu0 0
        %1618 = vmatprep.subr.bf16.mxu0 0
        %1619 = vmatpush2.bf16.msra.mxu0 0
        %1620 = vmatprep.subr.bf16.mxu0 0
        %1621 = vmatpush2.bf16.msra.mxu0 0
        %1622 = vmatprep.subr.bf16.mxu0 0
        %1623 = vmatpush2.bf16.msra.mxu0 0
        %1624 = vmatprep.subr.bf16.mxu0 0
        %1625 = vmatpush2.bf16.msra.mxu0 0
        %1626 = vmatprep.subr.bf16.mxu0 0
        %1627 = vmatpush2.bf16.msra.mxu0 0
        %1628 = vmatprep.subr.bf16.mxu0 0
        %1629 = vmatpush2.bf16.msra.mxu0 0
        %1630 = vmatprep.mubr.bf16.mxu0 0
        %1631 = vmatmul.mubr.bf16.gmra.mxu0 %v1593
        %v1632 = vpop.f32.mrf.mxu0
        %v1633 = vadd.f32 0.0, %v1632
        %v1634 = vpop.f32.mrf.mxu0
        %v1635 = vpop.f32.mrf.mxu0
        %v1636 = vpop.f32.mrf.mxu0
        %1637 = vdwg.mxu0
        %1638 = vrot.lane.b32.xlu0 %v930, 80
        %v1639 = vpop.permute.xlu0 %1638
        %v1641 = vsel %vm904, %v1589, 0
        %v1644 = vsel %vm934, %v1639, 0
        %1646 = vmatprep.subr.bf16.mxu0 0
        %1647 = vmatpush1.bf16.msra.mxu0 0
        %1648 = vmatprep.subr.bf16.mxu0 0
        %1649 = vmatpush1.bf16.msra.mxu0 0
        %1650 = vmatprep.subr.bf16.mxu0 0
        %1651 = vmatpush1.bf16.msra.mxu0 0
        %1652 = vmatprep.subr.bf16.mxu0 0
        %1653 = vmatpush1.bf16.msra.mxu0 0
        %1654 = vmatprep.subr.bf16.mxu0 0
        %1655 = vmatpush1.bf16.msra.mxu0 0
        %1656 = vmatprep.subr.bf16.mxu0 0
        %1657 = vmatpush1.bf16.msra.mxu0 0
        %1658 = vmatprep.subr.bf16.mxu0 0
        %1659 = vmatpush1.bf16.msra.mxu0 0
        %1660 = vmatprep.subr.bf16.mxu0 0
        %1661 = vmatpush1.bf16.msra.mxu0 %v1644
        %1662 = vmatprep.subr.bf16.mxu0 0
        %1663 = vmatpush2.bf16.msra.mxu0 0
        %1664 = vmatprep.subr.bf16.mxu0 0
        %1665 = vmatpush2.bf16.msra.mxu0 0
        %1666 = vmatprep.subr.bf16.mxu0 0
        %1667 = vmatpush2.bf16.msra.mxu0 0
        %1668 = vmatprep.subr.bf16.mxu0 0
        %1669 = vmatpush2.bf16.msra.mxu0 0
        %1670 = vmatprep.subr.bf16.mxu0 0
        %1671 = vmatpush2.bf16.msra.mxu0 0
        %1672 = vmatprep.subr.bf16.mxu0 0
        %1673 = vmatpush2.bf16.msra.mxu0 0
        %1674 = vmatprep.subr.bf16.mxu0 0
        %1675 = vmatpush2.bf16.msra.mxu0 0
        %1676 = vmatprep.subr.bf16.mxu0 0
        %1677 = vmatpush2.bf16.msra.mxu0 0
        %1678 = vmatprep.mubr.bf16.mxu0 0
        %1679 = vmatmul.mubr.bf16.gmra.mxu0 %v1641
        %v1680 = vpop.f32.mrf.mxu0
        %v1681 = vadd.f32 0.0, %v1680
        %v1682 = vpop.f32.mrf.mxu0
        %v1683 = vpop.f32.mrf.mxu0
        %v1684 = vpop.f32.mrf.mxu0
        %1685 = vdwg.mxu0
        %1688 = vrot.lane.b32.xlu0 %v1192, 16
        %v1689 = vpop.permute.xlu0 %1688
        %1690 = vrot.lane.b32.xlu0 %v1241, 16
        %v1691 = vpop.permute.xlu0 %1690
        %1696 = vrot.lane.b32.xlu0 %v1413, 32
        %v1697 = vpop.permute.xlu0 %1696
        %1698 = vrot.lane.b32.xlu0 %v1461, 32
        %v1699 = vpop.permute.xlu0 %1698
        %1704 = vrot.lane.b32.xlu0 %v1633, 48
        %v1705 = vpop.permute.xlu0 %1704
        %1706 = vrot.lane.b32.xlu0 %v1681, 48
        %v1707 = vpop.permute.xlu0 %1706
        %v1710 = vsel %vm808, %v973, %v1689
        %v1711 = vsel %vm808, %v1019, %v1691
        %v1712 = vsel %vm676, %v1710, %v1697
        %v1713 = vsel %vm676, %v1711, %v1699
        %vm1714 = vcmask 392192
        %v1715 = vsel %vm1714, %v1712, %v1705
        %v1716 = vsel %vm1714, %v1713, %v1707
        %v1717 = vpack.c.bf16 %v1716, %v1715
        %v1718 = vld [vmem:[%s630] sm:$0xf]
        %v1719 = vld [vmem:[%s630 + $0x4] sm:$0xf]
        %v1720 = vld [vmem:[%s630 + $0x8] sm:$0xf]
        %v1721 = vld [vmem:[%s630 + $0xc] sm:$0xf]
        %v1722 = vld [vmem:[%s630 + $0x10] sm:$0xf]
        %v1723 = vld [vmem:[%s630 + $0x14] sm:$0xf]
        %v1724 = vld [vmem:[%s630 + $0x18] sm:$0xf]
        %v1725 = vld [vmem:[%s630 + $0x1c] sm:$0xf]
        %v1726 = vld [vmem:[%s633] sm:$0x1]
        %v1728 = vlaneseq
        %v1729 = vshrl.u32 %v1728, 7
        %v1730 = vsub.s32 0, %v1729
        %v1731 = vrot.slane %v1726, %v1730
        %v1741 = vunpack.c.l.b16 %v1718
        %v1742 = vunpack.c.l.b16 %v1719
        %v1743 = vunpack.c.l.b16 %v1720
        %v1744 = vunpack.c.l.b16 %v1721
        %v1745 = vunpack.c.l.b16 %v1722
        %v1746 = vunpack.c.l.b16 %v1723
        %v1747 = vunpack.c.l.b16 %v1724
        %v1748 = vunpack.c.l.b16 %v1725
        %v1749 = vpack.c.b16 %v1742, %v1741
        %v1750 = vpack.c.b16 %v1744, %v1743
        %v1751 = vpack.c.b16 %v1746, %v1745
        %v1752 = vpack.c.b16 %v1748, %v1747
        %vm1757 = vcmask 523264
        %v1759 = vsel %vm1757, %v1717, 0
        %1761 = vmatprep.subr.bf16.mxu0 0
        %1762 = vmatpush1.bf16.msra.mxu0 0
        %1763 = vmatprep.subr.bf16.mxu0 0
        %1764 = vmatpush1.bf16.msra.mxu0 0
        %1765 = vmatprep.subr.bf16.mxu0 0
        %1766 = vmatpush1.bf16.msra.mxu0 0
        %1767 = vmatprep.subr.bf16.mxu0 0
        %1768 = vmatpush1.bf16.msra.mxu0 0
        %1769 = vmatprep.subr.bf16.mxu0 0
        %1770 = vmatpush1.bf16.msra.mxu0 %v1752
        %1771 = vmatprep.subr.bf16.mxu0 0
        %1772 = vmatpush1.bf16.msra.mxu0 %v1751
        %1773 = vmatprep.subr.bf16.mxu0 0
        %1774 = vmatpush1.bf16.msra.mxu0 %v1750
        %1775 = vmatprep.subr.bf16.mxu0 0
        %1776 = vmatpush1.bf16.msra.mxu0 %v1749
        %1777 = vmatprep.subr.bf16.mxu0 0
        %1778 = vmatpush2.bf16.msra.mxu0 0
        %1779 = vmatprep.subr.bf16.mxu0 0
        %1780 = vmatpush2.bf16.msra.mxu0 0
        %1781 = vmatprep.subr.bf16.mxu0 0
        %1782 = vmatpush2.bf16.msra.mxu0 0
        %1783 = vmatprep.subr.bf16.mxu0 0
        %1784 = vmatpush2.bf16.msra.mxu0 0
        %1785 = vmatprep.subr.bf16.mxu0 0
        %1786 = vmatpush2.bf16.msra.mxu0 0
        %1787 = vmatprep.subr.bf16.mxu0 0
        %1788 = vmatpush2.bf16.msra.mxu0 0
        %1789 = vmatprep.subr.bf16.mxu0 0
        %1790 = vmatpush2.bf16.msra.mxu0 0
        %1791 = vmatprep.subr.bf16.mxu0 0
        %1792 = vmatpush2.bf16.msra.mxu0 0
        %1793 = vmatprep.mubr.bf16.mxu0 0
        %1794 = vmatmul.mubr.bf16.gmra.mxu0 %v1759
        %v1795 = vpop.f32.mrf.mxu0
        %v1796 = vadd.f32 %v1731, %v1795
        %v1797 = vpop.f32.mrf.mxu0
        %v1798 = vpop.f32.mrf.mxu0
        %v1799 = vadd.f32 %v1731, %v1798
        %v1800 = vpop.f32.mrf.mxu0
        %1801 = vdwg.mxu0
        %v1802 = vadd.f32 %v666, %v1796
        %v1803 = vadd.f32 %v667, %v1799
        %v1804 = vld [vmem:[%s636] sm:$0x1]
        %v1805 = vld [vmem:[%s639] sm:$0x1]
        %v1806 = vsel %vm676, %v1802, 0.0
        %1807 = vadd.xlane.f32.xlu0 %v1806
        %v1808 = vpop.xlane.xlu0 %1807
        %v1809 = vsel %vm676, %v1803, 0.0
        %1810 = vadd.xlane.f32.xlu0 %v1809
        %v1811 = vpop.xlane.xlu0 %1810
        %v1812 = vmul.f32 %v1808, %v683
        %v1813 = vmul.f32 %v1811, %v683
        %v1814 = vsub.f32 %v1802, %v1812
        %v1815 = vsub.f32 %v1803, %v1813
        %v1816 = vmul.f32 %v1814, %v1814
        %v1817 = vmul.f32 %v1815, %v1815
        %v1818 = vsel %vm676, %v1816, 0.0
        %1819 = vadd.xlane.f32.xlu0 %v1818
        %v1820 = vpop.xlane.xlu0 %1819
        %v1821 = vsel %vm676, %v1817, 0.0
        %1822 = vadd.xlane.f32.xlu0 %v1821
        %v1823 = vpop.xlane.xlu0 %1822
        %v1824 = vmul.f32 %v1820, %v683
        %v1825 = vmul.f32 %v1823, %v683
        %v1826 = vadd.f32 %v1824, 1e-05
        %v1827 = vadd.f32 %v1825, 1e-05
        %v1828 = vrsqrt.pop %v1826
        %v1829 = vrsqrt.pop %v1827
        %v1830 = vmul.f32 %v1814, %v1828
        %v1831 = vmul.f32 %v1815, %v1829
        %v1833 = vlaneseq
        %v1834 = vshrl.u32 %v1833, 7
        %v1835 = vsub.s32 0, %v1834
        %v1836 = vrot.slane %v1804, %v1835
        %v1838 = vmul.f32 %v1830, %v1836
        %v1839 = vmul.f32 %v1831, %v1836
        %v1841 = vlaneseq
        %v1842 = vshrl.u32 %v1841, 7
        %v1843 = vsub.s32 0, %v1842
        %v1844 = vrot.slane %v1805, %v1843
        %v1846 = vadd.f32 %v1838, %v1844
        %v1847 = vadd.f32 %v1839, %v1844
        %v1848 = vpack.c.bf16 %v1847, %v1846
        %v1849 = vld [vmem:[%s644] sm:$0xf]
        %v1850 = vld [vmem:[%s644 + $0x4] sm:$0xf]
        %v1851 = vld [vmem:[%s644 + $0x8] sm:$0xf]
        %v1852 = vld [vmem:[%s644 + $0xc] sm:$0xf]
        %v1853 = vld [vmem:[%s647] sm:$0x1]
        %v1855 = vlaneseq
        %v1856 = vshrl.u32 %v1855, 7
        %v1857 = vsub.s32 0, %v1856
        %v1858 = vrot.slane %v1853, %v1857
        %v1864 = vunpack.c.l.b16 %v1849
        %v1865 = vunpack.c.l.b16 %v1850
        %v1866 = vunpack.c.l.b16 %v1851
        %v1867 = vunpack.c.l.b16 %v1852
        %v1868 = vpack.c.b16 %v1865, %v1864
        %v1869 = vpack.c.b16 %v1867, %v1866
        %v1873 = vsel %vm676, %v1848, 0
        %1875 = vmatprep.subr.bf16.mxu0 0
        %1876 = vmatpush1.bf16.msra.mxu0 0
        %1877 = vmatprep.subr.bf16.mxu0 0
        %1878 = vmatpush1.bf16.msra.mxu0 0
        %1879 = vmatprep.subr.bf16.mxu0 0
        %1880 = vmatpush1.bf16.msra.mxu0 0
        %1881 = vmatprep.subr.bf16.mxu0 0
        %1882 = vmatpush1.bf16.msra.mxu0 0
        %1883 = vmatprep.subr.bf16.mxu0 0
        %1884 = vmatpush1.bf16.msra.mxu0 0
        %1885 = vmatprep.subr.bf16.mxu0 0
        %1886 = vmatpush1.bf16.msra.mxu0 0
        %1887 = vmatprep.subr.bf16.mxu0 0
        %1888 = vmatpush1.bf16.msra.mxu0 %v1869
        %1889 = vmatprep.subr.bf16.mxu0 0
        %1890 = vmatpush1.bf16.msra.mxu0 %v1868
        %1891 = vmatprep.subr.bf16.mxu0 0
        %1892 = vmatpush2.bf16.msra.mxu0 0
        %1893 = vmatprep.subr.bf16.mxu0 0
        %1894 = vmatpush2.bf16.msra.mxu0 0
        %1895 = vmatprep.subr.bf16.mxu0 0
        %1896 = vmatpush2.bf16.msra.mxu0 0
        %1897 = vmatprep.subr.bf16.mxu0 0
        %1898 = vmatpush2.bf16.msra.mxu0 0
        %1899 = vmatprep.subr.bf16.mxu0 0
        %1900 = vmatpush2.bf16.msra.mxu0 0
        %1901 = vmatprep.subr.bf16.mxu0 0
        %1902 = vmatpush2.bf16.msra.mxu0 0
        %1903 = vmatprep.subr.bf16.mxu0 0
        %1904 = vmatpush2.bf16.msra.mxu0 0
        %1905 = vmatprep.subr.bf16.mxu0 0
        %1906 = vmatpush2.bf16.msra.mxu0 0
        %1907 = vmatprep.mubr.bf16.mxu0 0
        %1908 = vmatmul.mubr.bf16.gmra.mxu0 %v1873
        %v1909 = vpop.f32.mrf.mxu0
        %v1910 = vadd.f32 %v1858, %v1909
        %v1911 = vpop.f32.mrf.mxu0
        %v1912 = vpop.f32.mrf.mxu0
        %v1913 = vadd.f32 %v1858, %v1912
        %v1914 = vpop.f32.mrf.mxu0
        %1915 = vdwg.mxu0
        %v1916 = vmax.f32 %v1910, 0.0
        %v1917 = vmax.f32 %v1913, 0.0
        %v1918 = vpack.c.bf16 %v1917, %v1916
        %v1919 = vld [vmem:[%s652] sm:$0xf]
        %v1920 = vld [vmem:[%s652 + $0x4] sm:$0xf]
        %v1921 = vld [vmem:[%s652 + $0x8] sm:$0xf]
        %v1922 = vld [vmem:[%s652 + $0xc] sm:$0xf]
        %v1923 = vld [vmem:[%s652 + $0x10] sm:$0xf]
        %v1924 = vld [vmem:[%s652 + $0x14] sm:$0xf]
        %v1925 = vld [vmem:[%s652 + $0x18] sm:$0xf]
        %v1926 = vld [vmem:[%s652 + $0x1c] sm:$0xf]
        %v1927 = vld [vmem:[%s652 + $0x20] sm:$0xf]
        %v1928 = vld [vmem:[%s652 + $0x24] sm:$0xf]
        %v1929 = vld [vmem:[%s652 + $0x28] sm:$0xf]
        %v1930 = vld [vmem:[%s652 + $0x2c] sm:$0xf]
        %v1931 = vld [vmem:[%s652 + $0x30] sm:$0xf]
        %v1932 = vld [vmem:[%s652 + $0x34] sm:$0xf]
        %v1933 = vld [vmem:[%s652 + $0x38] sm:$0xf]
        %v1934 = vld [vmem:[%s652 + $0x3c] sm:$0xf]
        %v1935 = vld [vmem:[%s655] sm:$0x1]
        %v1937 = vlaneseq
        %v1938 = vshrl.u32 %v1937, 7
        %v1939 = vsub.s32 0, %v1938
        %v1940 = vrot.slane %v1935, %v1939
        %v1958 = vunpack.c.l.b16 %v1919
        %v1959 = vunpack.c.l.b16 %v1920
        %v1960 = vunpack.c.l.b16 %v1921
        %v1961 = vunpack.c.l.b16 %v1922
        %v1962 = vunpack.c.l.b16 %v1923
        %v1963 = vunpack.c.l.b16 %v1924
        %v1964 = vunpack.c.l.b16 %v1925
        %v1965 = vunpack.c.l.b16 %v1926
        %v1966 = vunpack.c.l.b16 %v1927
        %v1967 = vunpack.c.l.b16 %v1928
        %v1968 = vunpack.c.l.b16 %v1929
        %v1969 = vunpack.c.l.b16 %v1930
        %v1970 = vunpack.c.l.b16 %v1931
        %v1971 = vunpack.c.l.b16 %v1932
        %v1972 = vunpack.c.l.b16 %v1933
        %v1973 = vunpack.c.l.b16 %v1934
        %v1974 = vpack.c.b16 %v1959, %v1958
        %v1975 = vpack.c.b16 %v1961, %v1960
        %v1976 = vpack.c.b16 %v1963, %v1962
        %v1977 = vpack.c.b16 %v1965, %v1964
        %v1978 = vpack.c.b16 %v1967, %v1966
        %v1979 = vpack.c.b16 %v1969, %v1968
        %v1980 = vpack.c.b16 %v1971, %v1970
        %v1981 = vpack.c.b16 %v1973, %v1972
        %1990 = vmatprep.subr.bf16.mxu0 0
        %1991 = vmatpush1.bf16.msra.mxu0 %v1981
        %1992 = vmatprep.subr.bf16.mxu0 0
        %1993 = vmatpush1.bf16.msra.mxu0 %v1980
        %1994 = vmatprep.subr.bf16.mxu0 0
        %1995 = vmatpush1.bf16.msra.mxu0 %v1979
        %1996 = vmatprep.subr.bf16.mxu0 0
        %1997 = vmatpush1.bf16.msra.mxu0 %v1978
        %1998 = vmatprep.subr.bf16.mxu0 0
        %1999 = vmatpush1.bf16.msra.mxu0 %v1977
        %2000 = vmatprep.subr.bf16.mxu0 0
        %2001 = vmatpush1.bf16.msra.mxu0 %v1976
        %2002 = vmatprep.subr.bf16.mxu0 0
        %2003 = vmatpush1.bf16.msra.mxu0 %v1975
        %2004 = vmatprep.subr.bf16.mxu0 0
        %2005 = vmatpush1.bf16.msra.mxu0 %v1974
        %2006 = vmatprep.subr.bf16.mxu0 0
        %2007 = vmatpush2.bf16.msra.mxu0 0
        %2008 = vmatprep.subr.bf16.mxu0 0
        %2009 = vmatpush2.bf16.msra.mxu0 0
        %2010 = vmatprep.subr.bf16.mxu0 0
        %2011 = vmatpush2.bf16.msra.mxu0 0
        %2012 = vmatprep.subr.bf16.mxu0 0
        %2013 = vmatpush2.bf16.msra.mxu0 0
        %2014 = vmatprep.subr.bf16.mxu0 0
        %2015 = vmatpush2.bf16.msra.mxu0 0
        %2016 = vmatprep.subr.bf16.mxu0 0
        %2017 = vmatpush2.bf16.msra.mxu0 0
        %2018 = vmatprep.subr.bf16.mxu0 0
        %2019 = vmatpush2.bf16.msra.mxu0 0
        %2020 = vmatprep.subr.bf16.mxu0 0
        %2021 = vmatpush2.bf16.msra.mxu0 0
        %2022 = vmatprep.mubr.bf16.mxu0 0
        %2023 = vmatmul.mubr.bf16.gmra.mxu0 %v1918
        %v2024 = vpop.f32.mrf.mxu0
        %v2025 = vadd.f32 %v1940, %v2024
        %v2026 = vpop.f32.mrf.mxu0
        %v2027 = vpop.f32.mrf.mxu0
        %v2028 = vadd.f32 %v1940, %v2027
        %v2029 = vpop.f32.mrf.mxu0
        %2030 = vdwg.mxu0
        %v2031 = vadd.f32 %v1802, %v2025
        %v2032 = vadd.f32 %v1803, %v2028
        %2033 = vst.msk [vmem:[#allocation2] sm:$0xff] %vm676, %v2031
        %2034 = vst.msk [vmem:[#allocation2 + $0x8] sm:$0xff] %vm676, %v2032
        %p2035 = scmp.eq.s32.totalorder %s27, 1
        // Predicated region
        $region85: #{mha_transformer_forward.1} parent=79 // pred_check
          %p2036 = pneg %p2035
        $region86: #{mha_transformer_forward.1} parent=79 // pred_check_branch
          %2038 = sbr.rel (%p2036) target = $region88
        $region87: #{mha_transformer_forward.1} parent=79 // pred_region
          %v2039 = vpack.c.bf16 %v2032, %v2031
          %v2040 = vld [vmem:[%s13] sm:$0xf]
          %v2041 = vld [vmem:[%s13 + $0x4] sm:$0xf]
          %v2042 = vld [vmem:[%s13 + $0x8] sm:$0xf]
          %v2043 = vld [vmem:[%s13 + $0xc] sm:$0xf]
          %v2044 = vld [vmem:[%s14] sm:$0x1]
          %v2046 = vlaneseq
          %v2047 = vshrl.u32 %v2046, 7
          %v2048 = vsub.s32 0, %v2047
          %v2049 = vrot.slane %v2044, %v2048
          %v2055 = vunpack.c.l.b16 %v2040
          %v2056 = vunpack.c.l.b16 %v2041
          %v2057 = vunpack.c.l.b16 %v2042
          %v2058 = vunpack.c.l.b16 %v2043
          %v2059 = vpack.c.b16 %v2056, %v2055
          %v2060 = vpack.c.b16 %v2058, %v2057
          %v2064 = vsel %vm676, %v2039, 0
          %2066 = vmatprep.subr.bf16.mxu0 0
          %2067 = vmatpush1.bf16.msra.mxu0 0
          %2068 = vmatprep.subr.bf16.mxu0 0
          %2069 = vmatpush1.bf16.msra.mxu0 0
          %2070 = vmatprep.subr.bf16.mxu0 0
          %2071 = vmatpush1.bf16.msra.mxu0 0
          %2072 = vmatprep.subr.bf16.mxu0 0
          %2073 = vmatpush1.bf16.msra.mxu0 0
          %2074 = vmatprep.subr.bf16.mxu0 0
          %2075 = vmatpush1.bf16.msra.mxu0 0
          %2076 = vmatprep.subr.bf16.mxu0 0
          %2077 = vmatpush1.bf16.msra.mxu0 0
          %2078 = vmatprep.subr.bf16.mxu0 0
          %2079 = vmatpush1.bf16.msra.mxu0 %v2060
          %2080 = vmatprep.subr.bf16.mxu0 0
          %2081 = vmatpush1.bf16.msra.mxu0 %v2059
          %2082 = vmatprep.subr.bf16.mxu0 0
          %2083 = vmatpush2.bf16.msra.mxu0 0
          %2084 = vmatprep.subr.bf16.mxu0 0
          %2085 = vmatpush2.bf16.msra.mxu0 0
          %2086 = vmatprep.subr.bf16.mxu0 0
          %2087 = vmatpush2.bf16.msra.mxu0 0
          %2088 = vmatprep.subr.bf16.mxu0 0
          %2089 = vmatpush2.bf16.msra.mxu0 0
          %2090 = vmatprep.subr.bf16.mxu0 0
          %2091 = vmatpush2.bf16.msra.mxu0 0
          %2092 = vmatprep.subr.bf16.mxu0 0
          %2093 = vmatpush2.bf16.msra.mxu0 0
          %2094 = vmatprep.subr.bf16.mxu0 0
          %2095 = vmatpush2.bf16.msra.mxu0 0
          %2096 = vmatprep.subr.bf16.mxu0 0
          %2097 = vmatpush2.bf16.msra.mxu0 0
          %2098 = vmatprep.mubr.bf16.mxu0 0
          %2099 = vmatmul.mubr.bf16.gmra.mxu0 %v2064
          %v2100 = vpop.f32.mrf.mxu0
          %v2101 = vadd.f32 %v2049, %v2100
          %v2102 = vpop.f32.mrf.mxu0
          %v2103 = vpop.f32.mrf.mxu0
          %v2104 = vadd.f32 %v2049, %v2103
          %v2105 = vpop.f32.mrf.mxu0
          %2106 = vdwg.mxu0
          %2107 = vmax.xlane.f32.xlu0 %v2101
          %v2108 = vpop.xlane.xlu0 %2107
          %2109 = vmax.xlane.f32.xlu0 %v2104
          %v2110 = vpop.xlane.xlu0 %2109
          %v2111 = vsub.f32 %v2101, %v2108
          %v2112 = vsub.f32 %v2104, %v2110
          %v2113 = vmul.f32 %v2111, 1.442695
          %v2114 = vpow.pop %v2113
          %v2115 = vmul.f32 %v2112, 1.442695
          %v2116 = vpow.pop %v2115
          %2117 = vadd.xlane.f32.xlu0 %v2114
          %v2118 = vpop.xlane.xlu0 %2117
          %2119 = vadd.xlane.f32.xlu0 %v2116
          %v2120 = vpop.xlane.xlu0 %2119
          %v2121 = vlog2.pop %v2118
          %v2122 = vmul.f32 %v2121, 0.6931472
          %v2123 = vlog2.pop %v2120
          %v2124 = vmul.f32 %v2123, 0.6931472
          %v2125 = vadd.f32 %v2108, %v2122
          %v2126 = vadd.f32 %v2110, %v2124
          %v2127 = vsub.f32 %v2101, %v2125
          %v2128 = vsub.f32 %v2104, %v2126
          %2129 = vst [vmem:[#allocation3] sm:$0xff] %v2127
          %2130 = vst [vmem:[#allocation3 + $0x8] sm:$0xff] %v2128
        $region88: #{mha_transformer_forward.1} parent=79 // pred_fallthru
          _
        // Predicated region
        $region89: #{mha_transformer_forward.1} parent=79 // pred_check
          %p2131 = pneg %p415
        $region90: #{mha_transformer_forward.1} parent=79 // pred_check_branch
          %2133 = sbr.rel (%p2131) target = $region92
        $region91: #{mha_transformer_forward.1} parent=79 // pred_region
          %s2135 = ssub.s32 256, 256
          %2136 = vsyncadd [#allocation4], %s2135
          %s2137 = sshll.u32 [#allocation3], 4
          %s2138 = int_to_ptr.vmem [resolvable:$true] %s2137
          %2143 = dma.vmem_to_hbm [thread:$0]  %s2138, 256, %s15, [#allocation4], 128, 128, 8
        $region92: #{mha_transformer_forward.1} parent=79 // pred_fallthru
          _
        // Predicated region
        $region93: #{mha_transformer_forward.1} parent=79 // pred_check
          %p2144 = pneg %p415
        $region94: #{mha_transformer_forward.1} parent=79 // pred_check_branch
          %2146 = sbr.rel (%p2144) target = $region96
        $region95: #{mha_transformer_forward.1} parent=79 // pred_region
          %2147 = dma.done [#allocation4], 256
        $region96: #{mha_transformer_forward.1} parent=79 // pred_fallthru
          _
      $region80: #{mha_transformer_forward.1} parent=5 // pred_fallthru
        _
      %p2148 = scmp.le.s32.totalorder 2, %s22
      // Predicated region
      $region97: #{mha_transformer_forward.1} parent=5 // pred_check
        %p2149 = pneg %p2148
      $region98: #{mha_transformer_forward.1} parent=5 // pred_check_branch
        %2151 = sbr.rel (%p2149) target = $region100
      $region99: #{mha_transformer_forward.1} parent=5 // pred_region
        %s2152 = ssub.s32 %s22, 2
      $region100: #{mha_transformer_forward.1} parent=5 // pred_fallthru
        _
    $region6: #{mha_transformer_forward.1} parent=1 // loop_footer
      %s26 = sadd.s32 1, %s22
    $region7: #{mha_transformer_forward.1} parent=1 // loop_footer_branch
      %21 = sbr.rel target = $region3
    $region8: #{mha_transformer_forward.1} parent=1 // loop_exit
      _
    %2153 = vsyncpa [#allocation4], 1
    %s2154 = scalar_lea.sflag [#allocation4], 1
    %2155 = vsyncpa %s2154, 1

</llo_original>
